<compile_context>
chip_gen: v7x
topology: tpu7x:2x2x1
jax: 0.10.0
libtpu: 0.0.40
codegen_flags: <defaults>
</compile_context>

<pallas_src>
import jax
import jax.numpy as jnp
from jax.experimental import pallas as pl
from jax.experimental.pallas import tpu as pltpu

HEADS = 8


def _flash_attn_kernel(q_ref, k_ref, v_ref, wo_ref, bo_ref, o_ref,
                       m_scr, l_scr, acc_scr):
    H, TQ, dh = acc_scr.shape
    D = o_ref.shape[-1]

    ki = pl.program_id(2)
    nk = pl.num_programs(2)

    @pl.when(ki == 0)
    def _init():
        m_scr[...] = jnp.full(m_scr.shape, -jnp.inf, dtype=m_scr.dtype)
        l_scr[...] = jnp.zeros(l_scr.shape, dtype=l_scr.dtype)
        acc_scr[...] = jnp.zeros(acc_scr.shape, dtype=acc_scr.dtype)

    q = q_ref[0]                                  # (H, TQ, dh) bf16, pre-scaled
    k = k_ref[0]                                  # (H, TK, dh) bf16
    v = v_ref[0]                                  # (H, TK, dh) bf16

    # Scores: batched over heads, contraction over dh (no explicit transpose).
    s = jnp.einsum('hqe,hke->hqk', q, k,
                   preferred_element_type=jnp.float32)      # (H, TQ, TK) f32

    # Online-softmax update (all f32 elementwise math).
    m_prev = m_scr[...]
    m_new = jnp.maximum(m_prev, jnp.max(s, axis=-1, keepdims=True))
    alpha = jnp.exp(m_prev - m_new)
    p = jnp.exp(s - m_new)
    l_scr[...] = alpha * l_scr[...] + jnp.sum(p, axis=-1, keepdims=True)
    acc_scr[...] = alpha * acc_scr[...] + jnp.einsum(
        'hqk,hke->hqe', p.astype(jnp.bfloat16), v,
        preferred_element_type=jnp.float32)
    m_scr[...] = m_new

    @pl.when(ki == nk - 1)
    def _finalize():
        inv_l = pl.reciprocal(l_scr[...], approx=True)       # EUP, ~free
        ctx = (acc_scr[...] * inv_l).astype(jnp.bfloat16)     # (H, TQ, dh)
        # Output projection fused in: unrolled per-head 2-D MXU matmuls that
        # accumulate into one (TQ, D) f32 block -- equal to concat(ctx_h) @ Wo
        # but with no (H, TQ, D) temporary and no VPU/XLU head reduction.
        acc = jnp.zeros((TQ, D), dtype=jnp.float32)
        for h in range(H):                                    # static unroll
            acc = acc + jnp.dot(ctx[h], wo_ref[h],
                                preferred_element_type=jnp.float32)
        out = acc + bo_ref[...]                               # (TQ, D) f32
        o_ref[0] = out.astype(o_ref.dtype)                    # lane-dense store


def _pick_tile(n, target):
    """Largest divisor of n that is <= target, preferring multiples of 16
    (bf16 sublane packing), then 8; otherwise fall back to the full extent
    (always layout-legal)."""
    if n <= target:
        return n
    for mult in (16, 8):
        t = (target // mult) * mult
        while t >= mult:
            if n % t == 0:
                return t
            t -= mult
    return n


def _padded_bytes(shape, itemsize):
    """VMEM footprint with lane (128) / sublane (8) padding of the last dims."""
    shape = tuple(shape)
    if len(shape) == 1:
        shape = (1,) + shape
    lead = 1
    for s in shape[:-2]:
        lead *= int(s)
    sub = -(-int(shape[-2]) // 8) * 8
    lane = -(-int(shape[-1]) // 128) * 128
    return lead * sub * lane * itemsize


def cross_attention(x, wq, wk, wv, wo, bo, *, q_tile=256, kv_tile=None):
    B, N, D = x.shape
    H = HEADS
    assert D % H == 0
    dh = D // H
    out_dtype = x.dtype
    scale = 1.0 / (dh ** 0.5)

    # Chip-aware defaults: v7x has 64 MiB VMEM per TensorCore -> smaller KV
    # tiles and a tighter scoped-VMEM cap; v5e/v6e (128 MiB) take TK=512.
    try:
        vmem_cap = int(pltpu.get_tpu_info().vmem_capacity_bytes)
    except Exception:
        vmem_cap = 64 * 1024 * 1024
    if kv_tile is None:
        kv_tile = 256 if vmem_cap <= 80 * 1024 * 1024 else 512

    TQ = _pick_tile(N, q_tile)
    TK = _pick_tile(N, kv_tile)
    # v7x megacore: make sure there are >= 2 parallel (batch, q-tile) units so
    # both TensorCores get work; only split if an 8-aligned divisor exists.
    if B * (N // TQ) < 2:
        t = (TQ // 2 // 8) * 8
        while t >= 8:
            if N % t == 0:
                TQ = t
                break
            t -= 8

    grid = (B, N // TQ, N // TK)

    # --- Q/K/V projections hoisted to one-shot XLA GEMMs (full-D contraction,
    #     computed once, not once per q-tile); outputs are head-major bf16. ---
    x_bf = x.astype(jnp.bfloat16)
    q = jnp.einsum('bnd,de->bne', x_bf, wq.astype(jnp.bfloat16),
                   preferred_element_type=jnp.float32)
    k = jnp.einsum('bnd,de->bne', x_bf, wk.astype(jnp.bfloat16),
                   preferred_element_type=jnp.float32)
    v = jnp.einsum('bnd,de->bne', x_bf, wv.astype(jnp.bfloat16),
                   preferred_element_type=jnp.float32)
    q_hm = (q.reshape(B, N, H, dh) * scale).transpose(0, 2, 1, 3).astype(jnp.bfloat16)
    k_hm = k.reshape(B, N, H, dh).transpose(0, 2, 1, 3).astype(jnp.bfloat16)
    v_hm = v.reshape(B, N, H, dh).transpose(0, 2, 1, 3).astype(jnp.bfloat16)

    wo3 = wo.reshape(H, dh, D).astype(jnp.bfloat16)          # (H, dh, D)
    bo2 = bo.reshape(1, D).astype(jnp.float32)

    # Honest VMEM budget (double-buffered blocks, padded scratch, f32 score /
    # exp temporaries, finalize accumulator), clamped with >=16 MiB headroom.
    out_bytes = jnp.dtype(out_dtype).itemsize
    est = (2 * _padded_bytes((1, H, TQ, dh), 2)          # q block (x2 buffers)
           + 2 * 2 * _padded_bytes((1, H, TK, dh), 2)    # k + v blocks
           + 2 * _padded_bytes((1, TQ, D), out_bytes)    # output block
           + 2 * _padded_bytes((H, dh, D), 2)            # Wo (constant index)
           + 2 * _padded_bytes((1, D), 4)                # bias
           + 2 * _padded_bytes((H, TQ, 1), 4)            # m, l scratch
           + _padded_bytes((H, TQ, dh), 4)               # acc scratch
           + 3 * _padded_bytes((H, TQ, TK), 4)           # s / p / alpha temps
           + 2 * _padded_bytes((TQ, D), 4))              # finalize accumulator
    vmem_limit = int(min(max(2 * est, 32 * 1024 * 1024),
                         vmem_cap - 16 * 1024 * 1024))

    return pl.pallas_call(
        _flash_attn_kernel,
        out_shape=jax.ShapeDtypeStruct((B, N, D), out_dtype),
        grid=grid,
        in_specs=[
            pl.BlockSpec((1, H, TQ, dh), lambda b, qi, ki: (b, 0, qi, 0)),  # q
            pl.BlockSpec((1, H, TK, dh), lambda b, qi, ki: (b, 0, ki, 0)),  # k
            pl.BlockSpec((1, H, TK, dh), lambda b, qi, ki: (b, 0, ki, 0)),  # v
            pl.BlockSpec((H, dh, D), lambda b, qi, ki: (0, 0, 0)),          # Wo
            pl.BlockSpec((1, D), lambda b, qi, ki: (0, 0)),                 # bias
        ],
        out_specs=pl.BlockSpec((1, TQ, D), lambda b, qi, ki: (b, qi, 0)),
        scratch_shapes=[
            pltpu.VMEM((H, TQ, 1), jnp.float32),     # running max
            pltpu.VMEM((H, TQ, 1), jnp.float32),     # running denom
            pltpu.VMEM((H, TQ, dh), jnp.float32),    # running numerator
        ],
        compiler_params=pltpu.CompilerParams(
            dimension_semantics=("parallel", "parallel", "arbitrary"),
            vmem_limit_bytes=vmem_limit),
    )(q_hm, k_hm, v_hm, wo3, bo2)


def cross_attention_ref(x, wq, wk, wv, wo, bo):
    """Pure-JAX f32 reference for correctness checking."""
    B, N, D = x.shape
    dh = D // HEADS
    q = x @ wq
    k = x @ wk
    v = x @ wv
    q = q.reshape(B, N, HEADS, dh).transpose(0, 2, 1, 3)
    k = k.reshape(B, N, HEADS, dh).transpose(0, 2, 1, 3)
    v = v.reshape(B, N, HEADS, dh).transpose(0, 2, 1, 3)
    s = jnp.einsum("bhqd,bhkd->bhqk", q, k) / (dh ** 0.5)
    p = jax.nn.softmax(s, axis=-1)
    ctx = jnp.einsum("bhqk,bhkd->bhqd", p, v)
    ctx = ctx.transpose(0, 2, 1, 3).reshape(B, N, D)
    return ctx @ wo + bo


if __name__ == "__main__":
    B, N, D = 2, 8, 32   # batch=2, seq=8, dim=32, heads=8 -> head_dim=4

    key = jax.random.PRNGKey(0)
    kx, kq, kk, kv, ko, kb = jax.random.split(key, 6)
    x = jax.random.normal(kx, (B, N, D), dtype=jnp.float32)
    wq = 0.05 * jax.random.normal(kq, (D, D), dtype=jnp.float32)
    wk = 0.05 * jax.random.normal(kk, (D, D), dtype=jnp.float32)
    wv = 0.05 * jax.random.normal(kv, (D, D), dtype=jnp.float32)
    wo = 0.05 * jax.random.normal(ko, (D, D), dtype=jnp.float32)
    bo = 0.01 * jax.random.normal(kb, (D,), dtype=jnp.float32)

    out = cross_attention(x, wq, wk, wv, wo, bo)
    out = jax.block_until_ready(out)

    ref = cross_attention_ref(x, wq, wk, wv, wo, bo)
    assert out.shape == (B, N, D)
    max_err = float(jnp.max(jnp.abs(out - ref)))
    # bf16 matmul inputs + approximate reciprocal -> small drift vs f32 ref.
    assert jnp.allclose(out, ref, atol=2e-2, rtol=2e-2), (
        f"mismatch vs JAX reference (max abs err {max_err})")

    print("KERNEL_OK")
</pallas_src>

<mosaic_0001>
module attributes {stable_mosaic.version = 11 : i64} {
  func.func @_flash_attn_kernel(%arg0: i32, %arg1: i32, %arg2: i32, %arg3: memref<1x8x8x4xbf16, #tpu.memory_space<vmem>>, %arg4: memref<1x8x8x4xbf16, #tpu.memory_space<vmem>>, %arg5: memref<1x8x8x4xbf16, #tpu.memory_space<vmem>>, %arg6: memref<8x4x32xbf16, #tpu.memory_space<vmem>>, %arg7: memref<1x32xf32, #tpu.memory_space<vmem>>, %arg8: memref<1x8x32xf32, #tpu.memory_space<vmem>>, %arg9: memref<8x8x1xf32, #tpu.memory_space<vmem>>, %arg10: memref<8x8x1xf32, #tpu.memory_space<vmem>>, %arg11: memref<8x8x4xf32, #tpu.memory_space<vmem>>) attributes {dimension_semantics = [#tpu.dimension_semantics<parallel>, #tpu.dimension_semantics<parallel>, #tpu.dimension_semantics<arbitrary>], iteration_bounds = array<i64: 2, 1, 1>, scalar_prefetch = 0 : i64, scratch_operands = 3 : i64, tpu.core_type = #tpu.core_type<tc>, window_params = [{transform_indices = @transform_0, window_bounds = array<i64: 1, 8, 8, 4>}, {transform_indices = @transform_1, window_bounds = array<i64: 1, 8, 8, 4>}, {transform_indices = @transform_2, window_bounds = array<i64: 1, 8, 8, 4>}, {pipeline_mode = #tpu.pipeline_mode<synchronous>, transform_indices = @transform_3, window_bounds = array<i64: 8, 4, 32>}, {pipeline_mode = #tpu.pipeline_mode<synchronous>, transform_indices = @transform_4, window_bounds = array<i64: 1, 32>}, {transform_indices = @transform_5, window_bounds = array<i64: 1, 8, 32>}]} {
    %c0_i32 = arith.constant 0 : i32
    %0 = arith.cmpi eq, %arg2, %c0_i32 : i32
    %1 = arith.extui %0 : i1 to i32
    %c0_i32_0 = arith.constant 0 : i32
    %2 = arith.cmpi ne, %1, %c0_i32_0 : i32
    scf.if %2 {
      %cst_35 = arith.constant 0xFF800000 : f32
      %36 = vector.broadcast %cst_35 : f32 to vector<8x8x1xf32>
      %c0_36 = arith.constant 0 : index
      %c0_37 = arith.constant 0 : index
      %c0_38 = arith.constant 0 : index
      %37 = vector.load %arg9[%c0_36, %c0_37, %c0_38] : memref<8x8x1xf32, #tpu.memory_space<vmem>>, vector<8x8x1xf32>
      tpu.vector_store %arg9[%c0_36, %c0_37, %c0_38], %36 {strides = array<i32>} : memref<8x8x1xf32, #tpu.memory_space<vmem>>, vector<8x8x1xf32>,
      %cst_39 = arith.constant 0.000000e+00 : f32
      %38 = vector.broadcast %cst_39 : f32 to vector<8x8x1xf32>
      %c0_40 = arith.constant 0 : index
      %c0_41 = arith.constant 0 : index
      %c0_42 = arith.constant 0 : index
      %39 = vector.load %arg10[%c0_40, %c0_41, %c0_42] : memref<8x8x1xf32, #tpu.memory_space<vmem>>, vector<8x8x1xf32>
      tpu.vector_store %arg10[%c0_40, %c0_41, %c0_42], %38 {strides = array<i32>} : memref<8x8x1xf32, #tpu.memory_space<vmem>>, vector<8x8x1xf32>,
      %cst_43 = arith.constant 0.000000e+00 : f32
      %40 = vector.broadcast %cst_43 : f32 to vector<8x8x4xf32>
      %c0_44 = arith.constant 0 : index
      %c0_45 = arith.constant 0 : index
      %c0_46 = arith.constant 0 : index
      %41 = vector.load %arg11[%c0_44, %c0_45, %c0_46] : memref<8x8x4xf32, #tpu.memory_space<vmem>>, vector<8x8x4xf32>
      tpu.vector_store %arg11[%c0_44, %c0_45, %c0_46], %40 {strides = array<i32>} : memref<8x8x4xf32, #tpu.memory_space<vmem>>, vector<8x8x4xf32>,
    } else {
    }
    %c0 = arith.constant 0 : index
    %c0_1 = arith.constant 0 : index
    %c0_2 = arith.constant 0 : index
    %c0_3 = arith.constant 0 : index
    %3 = vector.load %arg3[%c0, %c0_1, %c0_2, %c0_3] : memref<1x8x8x4xbf16, #tpu.memory_space<vmem>>, vector<1x8x8x4xbf16>
    %4 = vector.shape_cast %3 : vector<1x8x8x4xbf16> to vector<8x8x4xbf16>
    %c0_4 = arith.constant 0 : index
    %c0_5 = arith.constant 0 : index
    %c0_6 = arith.constant 0 : index
    %c0_7 = arith.constant 0 : index
    %5 = vector.load %arg4[%c0_4, %c0_5, %c0_6, %c0_7] : memref<1x8x8x4xbf16, #tpu.memory_space<vmem>>, vector<1x8x8x4xbf16>
    %6 = vector.shape_cast %5 : vector<1x8x8x4xbf16> to vector<8x8x4xbf16>
    %c0_8 = arith.constant 0 : index
    %c0_9 = arith.constant 0 : index
    %c0_10 = arith.constant 0 : index
    %c0_11 = arith.constant 0 : index
    %7 = vector.load %arg5[%c0_8, %c0_9, %c0_10, %c0_11] : memref<1x8x8x4xbf16, #tpu.memory_space<vmem>>, vector<1x8x8x4xbf16>
    %8 = vector.shape_cast %7 : vector<1x8x8x4xbf16> to vector<8x8x4xbf16>
    "tpu.trace_start"() <{level = 10 : i32, message = "hqe,hke->hqk"}> : () -> ()
    %cst = arith.constant dense<0.000000e+00> : vector<8x8x8xf32>
    %9 = tpu.matmul %4, %6, %cst {dimension_numbers = #tpu.dot_dimension_numbers<[2], [2], [1], [1], [0, 0, 0, 1, 1, 1], [0], [0]>} : vector<8x8x4xbf16>, vector<8x8x4xbf16>, vector<8x8x8xf32> -> vector<8x8x8xf32>
    "tpu.trace_stop"() : () -> ()
    %c0_12 = arith.constant 0 : index
    %c0_13 = arith.constant 0 : index
    %c0_14 = arith.constant 0 : index
    %10 = vector.load %arg9[%c0_12, %c0_13, %c0_14] : memref<8x8x1xf32, #tpu.memory_space<vmem>>, vector<8x8x1xf32>
    %cst_15 = arith.constant dense<0xFF800000> : vector<8x8xf32>
    %11 = vector.multi_reduction <maximumf>, %9, %cst_15 [2] : vector<8x8x8xf32> to vector<8x8xf32>
    %12 = vector.shape_cast %11 : vector<8x8xf32> to vector<8x8x1xf32>
    %13 = arith.maximumf %10, %12 : vector<8x8x1xf32>
    %14 = arith.subf %10, %13 : vector<8x8x1xf32>
    %15 = math.exp %14 : vector<8x8x1xf32>
    %16 = vector.broadcast %13 : vector<8x8x1xf32> to vector<8x8x8xf32>
    %17 = arith.subf %9, %16 : vector<8x8x8xf32>
    %18 = math.exp %17 : vector<8x8x8xf32>
    %c0_16 = arith.constant 0 : index
    %c0_17 = arith.constant 0 : index
    %c0_18 = arith.constant 0 : index
    %19 = vector.load %arg10[%c0_16, %c0_17, %c0_18] : memref<8x8x1xf32, #tpu.memory_space<vmem>>, vector<8x8x1xf32>
    %20 = arith.mulf %15, %19 : vector<8x8x1xf32>
    %cst_19 = arith.constant dense<0.000000e+00> : vector<8x8xf32>
    %21 = vector.multi_reduction <add>, %18, %cst_19 [2] : vector<8x8x8xf32> to vector<8x8xf32>
    %22 = vector.shape_cast %21 : vector<8x8xf32> to vector<8x8x1xf32>
    %23 = arith.addf %20, %22 : vector<8x8x1xf32>
    %c0_20 = arith.constant 0 : index
    %c0_21 = arith.constant 0 : index
    %c0_22 = arith.constant 0 : index
    %24 = vector.load %arg10[%c0_20, %c0_21, %c0_22] : memref<8x8x1xf32, #tpu.memory_space<vmem>>, vector<8x8x1xf32>
    tpu.vector_store %arg10[%c0_20, %c0_21, %c0_22], %23 {strides = array<i32>} : memref<8x8x1xf32, #tpu.memory_space<vmem>>, vector<8x8x1xf32>,
    %c0_23 = arith.constant 0 : index
    %c0_24 = arith.constant 0 : index
    %c0_25 = arith.constant 0 : index
    %25 = vector.load %arg11[%c0_23, %c0_24, %c0_25] : memref<8x8x4xf32, #tpu.memory_space<vmem>>, vector<8x8x4xf32>
    %26 = vector.broadcast %15 : vector<8x8x1xf32> to vector<8x8x4xf32>
    %27 = arith.mulf %26, %25 : vector<8x8x4xf32>
    %28 = arith.truncf %18 : vector<8x8x8xf32> to vector<8x8x8xbf16>
    "tpu.trace_start"() <{level = 10 : i32, message = "hqk,hke->hqe"}> : () -> ()
    %cst_26 = arith.constant dense<0.000000e+00> : vector<8x8x4xf32>
    %29 = tpu.matmul %28, %8, %cst_26 {dimension_numbers = #tpu.dot_dimension_numbers<[2], [1], [1], [2], [0, 0, 0, 1, 1, 2], [0], [0]>} : vector<8x8x8xbf16>, vector<8x8x4xbf16>, vector<8x8x4xf32> -> vector<8x8x4xf32>
    "tpu.trace_stop"() : () -> ()
    %30 = arith.addf %27, %29 : vector<8x8x4xf32>
    %c0_27 = arith.constant 0 : index
    %c0_28 = arith.constant 0 : index
    %c0_29 = arith.constant 0 : index
    %31 = vector.load %arg11[%c0_27, %c0_28, %c0_29] : memref<8x8x4xf32, #tpu.memory_space<vmem>>, vector<8x8x4xf32>
    tpu.vector_store %arg11[%c0_27, %c0_28, %c0_29], %30 {strides = array<i32>} : memref<8x8x4xf32, #tpu.memory_space<vmem>>, vector<8x8x4xf32>,
    %c0_30 = arith.constant 0 : index
    %c0_31 = arith.constant 0 : index
    %c0_32 = arith.constant 0 : index
    %32 = vector.load %arg9[%c0_30, %c0_31, %c0_32] : memref<8x8x1xf32, #tpu.memory_space<vmem>>, vector<8x8x1xf32>
    tpu.vector_store %arg9[%c0_30, %c0_31, %c0_32], %13 {strides = array<i32>} : memref<8x8x1xf32, #tpu.memory_space<vmem>>, vector<8x8x1xf32>,
    %c0_i32_33 = arith.constant 0 : i32
    %33 = arith.cmpi eq, %arg2, %c0_i32_33 : i32
    %34 = arith.extui %33 : i1 to i32
    %c0_i32_34 = arith.constant 0 : i32
    %35 = arith.cmpi ne, %34, %c0_i32_34 : i32
    scf.if %35 {
      %c0_35 = arith.constant 0 : index
      %c0_36 = arith.constant 0 : index
      %c0_37 = arith.constant 0 : index
      %36 = vector.load %arg10[%c0_35, %c0_36, %c0_37] : memref<8x8x1xf32, #tpu.memory_space<vmem>>, vector<8x8x1xf32>
      %37 = tpu.reciprocal %36 {approx = true} : vector<8x8x1xf32> -> vector<8x8x1xf32>
      %c0_38 = arith.constant 0 : index
      %c0_39 = arith.constant 0 : index
      %c0_40 = arith.constant 0 : index
      %38 = vector.load %arg11[%c0_38, %c0_39, %c0_40] : memref<8x8x4xf32, #tpu.memory_space<vmem>>, vector<8x8x4xf32>
      %39 = vector.broadcast %37 : vector<8x8x1xf32> to vector<8x8x4xf32>
      %40 = arith.mulf %38, %39 : vector<8x8x4xf32>
      %41 = arith.truncf %40 : vector<8x8x4xf32> to vector<8x8x4xbf16>
      %cst_41 = arith.constant 0.000000e+00 : f32
      %42 = vector.broadcast %cst_41 : f32 to vector<8x32xf32>
      %43 = vector.extract_strided_slice %41 {offsets = [0, 0, 0], sizes = [1, 8, 4], strides = [1, 1, 1]} : vector<8x8x4xbf16> to vector<1x8x4xbf16>
      %44 = vector.shape_cast %43 : vector<1x8x4xbf16> to vector<8x4xbf16>
      %c0_42 = arith.constant 0 : index
      %c0_43 = arith.constant 0 : index
      %c0_44 = arith.constant 0 : index
      %45 = vector.load %arg6[%c0_42, %c0_43, %c0_44] : memref<8x4x32xbf16, #tpu.memory_space<vmem>>, vector<1x4x32xbf16>
      %46 = vector.shape_cast %45 : vector<1x4x32xbf16> to vector<4x32xbf16>
      %cst_45 = arith.constant dense<0.000000e+00> : vector<8x32xf32>
      %47 = tpu.matmul %44, %46, %cst_45 {dimension_numbers = #tpu.dot_dimension_numbers<[1], [0], [0], [1], [0, 0, 1, 1], [], []>} : vector<8x4xbf16>, vector<4x32xbf16>, vector<8x32xf32> -> vector<8x32xf32>
      %48 = arith.addf %42, %47 : vector<8x32xf32>
      %49 = vector.extract_strided_slice %41 {offsets = [1, 0, 0], sizes = [1, 8, 4], strides = [1, 1, 1]} : vector<8x8x4xbf16> to vector<1x8x4xbf16>
      %50 = vector.shape_cast %49 : vector<1x8x4xbf16> to vector<8x4xbf16>
      %c1 = arith.constant 1 : index
      %c0_46 = arith.constant 0 : index
      %c0_47 = arith.constant 0 : index
      %51 = vector.load %arg6[%c1, %c0_46, %c0_47] : memref<8x4x32xbf16, #tpu.memory_space<vmem>>, vector<1x4x32xbf16>
      %52 = vector.shape_cast %51 : vector<1x4x32xbf16> to vector<4x32xbf16>
      %cst_48 = arith.constant dense<0.000000e+00> : vector<8x32xf32>
      %53 = tpu.matmul %50, %52, %cst_48 {dimension_numbers = #tpu.dot_dimension_numbers<[1], [0], [0], [1], [0, 0, 1, 1], [], []>} : vector<8x4xbf16>, vector<4x32xbf16>, vector<8x32xf32> -> vector<8x32xf32>
      %54 = arith.addf %48, %53 : vector<8x32xf32>
      %55 = vector.extract_strided_slice %41 {offsets = [2, 0, 0], sizes = [1, 8, 4], strides = [1, 1, 1]} : vector<8x8x4xbf16> to vector<1x8x4xbf16>
      %56 = vector.shape_cast %55 : vector<1x8x4xbf16> to vector<8x4xbf16>
      %c2 = arith.constant 2 : index
      %c0_49 = arith.constant 0 : index
      %c0_50 = arith.constant 0 : index
      %57 = vector.load %arg6[%c2, %c0_49, %c0_50] : memref<8x4x32xbf16, #tpu.memory_space<vmem>>, vector<1x4x32xbf16>
      %58 = vector.shape_cast %57 : vector<1x4x32xbf16> to vector<4x32xbf16>
      %cst_51 = arith.constant dense<0.000000e+00> : vector<8x32xf32>
      %59 = tpu.matmul %56, %58, %cst_51 {dimension_numbers = #tpu.dot_dimension_numbers<[1], [0], [0], [1], [0, 0, 1, 1], [], []>} : vector<8x4xbf16>, vector<4x32xbf16>, vector<8x32xf32> -> vector<8x32xf32>
      %60 = arith.addf %54, %59 : vector<8x32xf32>
      %61 = vector.extract_strided_slice %41 {offsets = [3, 0, 0], sizes = [1, 8, 4], strides = [1, 1, 1]} : vector<8x8x4xbf16> to vector<1x8x4xbf16>
      %62 = vector.shape_cast %61 : vector<1x8x4xbf16> to vector<8x4xbf16>
      %c3 = arith.constant 3 : index
      %c0_52 = arith.constant 0 : index
      %c0_53 = arith.constant 0 : index
      %63 = vector.load %arg6[%c3, %c0_52, %c0_53] : memref<8x4x32xbf16, #tpu.memory_space<vmem>>, vector<1x4x32xbf16>
      %64 = vector.shape_cast %63 : vector<1x4x32xbf16> to vector<4x32xbf16>
      %cst_54 = arith.constant dense<0.000000e+00> : vector<8x32xf32>
      %65 = tpu.matmul %62, %64, %cst_54 {dimension_numbers = #tpu.dot_dimension_numbers<[1], [0], [0], [1], [0, 0, 1, 1], [], []>} : vector<8x4xbf16>, vector<4x32xbf16>, vector<8x32xf32> -> vector<8x32xf32>
      %66 = arith.addf %60, %65 : vector<8x32xf32>
      %67 = vector.extract_strided_slice %41 {offsets = [4, 0, 0], sizes = [1, 8, 4], strides = [1, 1, 1]} : vector<8x8x4xbf16> to vector<1x8x4xbf16>
      %68 = vector.shape_cast %67 : vector<1x8x4xbf16> to vector<8x4xbf16>
      %c4 = arith.constant 4 : index
      %c0_55 = arith.constant 0 : index
      %c0_56 = arith.constant 0 : index
      %69 = vector.load %arg6[%c4, %c0_55, %c0_56] : memref<8x4x32xbf16, #tpu.memory_space<vmem>>, vector<1x4x32xbf16>
      %70 = vector.shape_cast %69 : vector<1x4x32xbf16> to vector<4x32xbf16>
      %cst_57 = arith.constant dense<0.000000e+00> : vector<8x32xf32>
      %71 = tpu.matmul %68, %70, %cst_57 {dimension_numbers = #tpu.dot_dimension_numbers<[1], [0], [0], [1], [0, 0, 1, 1], [], []>} : vector<8x4xbf16>, vector<4x32xbf16>, vector<8x32xf32> -> vector<8x32xf32>
      %72 = arith.addf %66, %71 : vector<8x32xf32>
      %73 = vector.extract_strided_slice %41 {offsets = [5, 0, 0], sizes = [1, 8, 4], strides = [1, 1, 1]} : vector<8x8x4xbf16> to vector<1x8x4xbf16>
      %74 = vector.shape_cast %73 : vector<1x8x4xbf16> to vector<8x4xbf16>
      %c5 = arith.constant 5 : index
      %c0_58 = arith.constant 0 : index
      %c0_59 = arith.constant 0 : index
      %75 = vector.load %arg6[%c5, %c0_58, %c0_59] : memref<8x4x32xbf16, #tpu.memory_space<vmem>>, vector<1x4x32xbf16>
      %76 = vector.shape_cast %75 : vector<1x4x32xbf16> to vector<4x32xbf16>
      %cst_60 = arith.constant dense<0.000000e+00> : vector<8x32xf32>
      %77 = tpu.matmul %74, %76, %cst_60 {dimension_numbers = #tpu.dot_dimension_numbers<[1], [0], [0], [1], [0, 0, 1, 1], [], []>} : vector<8x4xbf16>, vector<4x32xbf16>, vector<8x32xf32> -> vector<8x32xf32>
      %78 = arith.addf %72, %77 : vector<8x32xf32>
      %79 = vector.extract_strided_slice %41 {offsets = [6, 0, 0], sizes = [1, 8, 4], strides = [1, 1, 1]} : vector<8x8x4xbf16> to vector<1x8x4xbf16>
      %80 = vector.shape_cast %79 : vector<1x8x4xbf16> to vector<8x4xbf16>
      %c6 = arith.constant 6 : index
      %c0_61 = arith.constant 0 : index
      %c0_62 = arith.constant 0 : index
      %81 = vector.load %arg6[%c6, %c0_61, %c0_62] : memref<8x4x32xbf16, #tpu.memory_space<vmem>>, vector<1x4x32xbf16>
      %82 = vector.shape_cast %81 : vector<1x4x32xbf16> to vector<4x32xbf16>
      %cst_63 = arith.constant dense<0.000000e+00> : vector<8x32xf32>
      %83 = tpu.matmul %80, %82, %cst_63 {dimension_numbers = #tpu.dot_dimension_numbers<[1], [0], [0], [1], [0, 0, 1, 1], [], []>} : vector<8x4xbf16>, vector<4x32xbf16>, vector<8x32xf32> -> vector<8x32xf32>
      %84 = arith.addf %78, %83 : vector<8x32xf32>
      %85 = vector.extract_strided_slice %41 {offsets = [7, 0, 0], sizes = [1, 8, 4], strides = [1, 1, 1]} : vector<8x8x4xbf16> to vector<1x8x4xbf16>
      %86 = vector.shape_cast %85 : vector<1x8x4xbf16> to vector<8x4xbf16>
      %c7 = arith.constant 7 : index
      %c0_64 = arith.constant 0 : index
      %c0_65 = arith.constant 0 : index
      %87 = vector.load %arg6[%c7, %c0_64, %c0_65] : memref<8x4x32xbf16, #tpu.memory_space<vmem>>, vector<1x4x32xbf16>
      %88 = vector.shape_cast %87 : vector<1x4x32xbf16> to vector<4x32xbf16>
      %cst_66 = arith.constant dense<0.000000e+00> : vector<8x32xf32>
      %89 = tpu.matmul %86, %88, %cst_66 {dimension_numbers = #tpu.dot_dimension_numbers<[1], [0], [0], [1], [0, 0, 1, 1], [], []>} : vector<8x4xbf16>, vector<4x32xbf16>, vector<8x32xf32> -> vector<8x32xf32>
      %90 = arith.addf %84, %89 : vector<8x32xf32>
      %c0_67 = arith.constant 0 : index
      %c0_68 = arith.constant 0 : index
      %91 = vector.load %arg7[%c0_67, %c0_68] : memref<1x32xf32, #tpu.memory_space<vmem>>, vector<1x32xf32>
      %92 = vector.broadcast %91 : vector<1x32xf32> to vector<8x32xf32>
      %93 = arith.addf %90, %92 : vector<8x32xf32>
      %c0_69 = arith.constant 0 : index
      %c0_70 = arith.constant 0 : index
      %c0_71 = arith.constant 0 : index
      %94 = vector.load %arg8[%c0_69, %c0_70, %c0_71] : memref<1x8x32xf32, #tpu.memory_space<vmem>>, vector<1x8x32xf32>
      %95 = vector.shape_cast %94 : vector<1x8x32xf32> to vector<8x32xf32>
      %96 = vector.shape_cast %93 : vector<8x32xf32> to vector<1x8x32xf32>
      tpu.vector_store %arg8[%c0_69, %c0_70, %c0_71], %96 {strides = array<i32>} : memref<1x8x32xf32, #tpu.memory_space<vmem>>, vector<1x8x32xf32>,
    } else {
    }
    return
  }
  func.func @transform_0(%arg0: i32, %arg1: i32, %arg2: i32) -> (i32, i32, i32, i32) {
    %c0_i32 = arith.constant 0 : i32
    %c0_i32_0 = arith.constant 0 : i32
    %c0_i32_1 = arith.constant 0 : i32
    return %arg0, %c0_i32, %arg1, %c0_i32_0 : i32, i32, i32, i32
  }
  func.func @transform_1(%arg0: i32, %arg1: i32, %arg2: i32) -> (i32, i32, i32, i32) {
    %c0_i32 = arith.constant 0 : i32
    %c0_i32_0 = arith.constant 0 : i32
    %c0_i32_1 = arith.constant 0 : i32
    return %arg0, %c0_i32, %arg2, %c0_i32_0 : i32, i32, i32, i32
  }
  func.func @transform_2(%arg0: i32, %arg1: i32, %arg2: i32) -> (i32, i32, i32, i32) {
    %c0_i32 = arith.constant 0 : i32
    %c0_i32_0 = arith.constant 0 : i32
    %c0_i32_1 = arith.constant 0 : i32
    return %arg0, %c0_i32, %arg2, %c0_i32_0 : i32, i32, i32, i32
  }
  func.func @transform_3(%arg0: i32, %arg1: i32, %arg2: i32) -> (i32, i32, i32) {
    %c0_i32 = arith.constant 0 : i32
    %c0_i32_0 = arith.constant 0 : i32
    %c0_i32_1 = arith.constant 0 : i32
    %c0_i32_2 = arith.constant 0 : i32
    return %c0_i32, %c0_i32_0, %c0_i32_1 : i32, i32, i32
  }
  func.func @transform_4(%arg0: i32, %arg1: i32, %arg2: i32) -> (i32, i32) {
    %c0_i32 = arith.constant 0 : i32
    %c0_i32_0 = arith.constant 0 : i32
    %c0_i32_1 = arith.constant 0 : i32
    return %c0_i32, %c0_i32_0 : i32, i32
  }
  func.func @transform_5(%arg0: i32, %arg1: i32, %arg2: i32) -> (i32, i32, i32) {
    %c0_i32 = arith.constant 0 : i32
    %c0_i32_0 = arith.constant 0 : i32
    return %arg0, %arg1, %c0_i32 : i32, i32, i32
  }
}

</mosaic_0001>

<llo_original>
// kernel: tpu_custom_call.1
$region0: #{tpu_custom_call.1}
  #allocation0 [shape = 'u32[]', space=smem, size = 0x4, offset = 0x4, fixed_abs, tag = 'smem constant byte address 0x4 - core index']
  #allocation1 [shape = 'u32[144,128]{1,0:T(1,128)}', space=vmem, size = 0x12000, scoped, tag = 'internal scratch']
  #allocation2 [shape = 'f32[8,8,1]{2,1,0:T(8,128)}', space=vmem, size = 0x8000, scoped, tag = 'scratch operand']
  #allocation3 [shape = 'f32[8,8,1]{2,1,0:T(8,128)}', space=vmem, size = 0x8000, scoped, tag = 'scratch operand']
  #allocation4 [shape = 'f32[8,8,4]{2,1,0:T(8,128)}', space=vmem, size = 0x8000, scoped, tag = 'scratch operand']
  %s0 = inlined_call_operand.vmem [shape: bf16[2,8,8,4], index: 0, kind: input, shape index: {}]
  %s1 = inlined_call_operand.vmem [shape: bf16[2,8,8,4], index: 1, kind: input, shape index: {}]
  %s2 = inlined_call_operand.vmem [shape: bf16[2,8,8,4], index: 2, kind: input, shape index: {}]
  %s3 = inlined_call_operand.vmem [shape: bf16[8,4,32], index: 3, kind: input, shape index: {}]
  %s4 = inlined_call_operand.vmem [shape: f32[1,32], index: 4, kind: input, shape index: {}]
  %s5 = inlined_call_operand.hbm [shape: f32[2,8,32], index: 5, kind: output, shape index: {}]
  %s6 = sld [smem:[#allocation0]]
  $region61: #{tpu_custom_call.1} parent=0
    _
  %s8 = ssub.s32 1, %s6
  %s9 = scalar_select 0, %s8, %s6
  $region1: #{tpu_custom_call.1} parent=0
    #allocation5 [shape = 'u8[8192]{0}', space=vmem, size = 0x2000, scoped, tag = 'output window, operand 0']
    #allocation6 [shape = 's32[2]{0}', space=sflag, size = 0x8, scoped, tag = 'scoped memory for tpu_custom_call.1']
    %10 = vsyncpa [#allocation6], 0
    %s11 = scalar_lea.sflag [#allocation6], 1
    %12 = vsyncpa %s11, 0
    loop: start=0, step=1, limit=4
    $region2: #{tpu_custom_call.1} parent=1 // loop_pre_header
      _
    $region3: #{tpu_custom_call.1} parent=1 // loop_header
      %s14 = sphi 0, %s18
      %p15 = scmp.ge.s32.totalorder %s14, 4
      %s21 = sphi 0, %s40
      %s22 = sphi 0, %s36
      %s23 = sphi 0, %s32
      %s24 = sphi 0, %s21
      %s25 = sphi 0, %s22
      %s26 = sphi 0, %s23
      %s27 = sphi 0, %s24
      %s28 = sphi 0, %s25
      %s29 = sphi 0, %s26
      %s45 = sphi 0, %s47
      %s48 = sphi 0, %s45
      %s49 = sphi 0, %s48
      %s65 = sphi 0, %s49
      %s73 = sphi 0, %s75
      %s76 = sphi 0, %s73
      %s77 = sphi 0, %s76
      %s93 = sphi 0, %s77
      %s101 = sphi 0, %s103
      %s104 = sphi 0, %s101
      %s105 = sphi 0, %s104
      %s121 = sphi 0, %s105
      %s125 = sphi 0, %s125
      %s127 = sphi 0, %s125
      %s128 = sphi 0, %s127
      %s142 = sphi 0, %s128
      %s146 = sphi 0, %s146
      %s148 = sphi 0, %s146
      %s149 = sphi 0, %s148
      %s163 = sphi 0, %s149
      %s171 = sphi 0, %s173
      %s174 = sphi 0, %s171
      %s175 = sphi 0, %s174
      %s191 = sphi 0, %s175
    $region4: #{tpu_custom_call.1} parent=1 // loop_header_branch
      %17 = sbr.rel (%p15) target = $region8
    $region5: #{tpu_custom_call.1} parent=1 // loop_body
      %s19 = ssub.s32 %s14, 1
      %s20 = ssub.s32 %s14, 2
      %s30 = sadd.s32 1, %s23
      %p31 = scmp.ge.s32.totalorder %s30, 1
      %s32 = scalar_select %p31, 0, %s30
      %s33 = sadd.s32 1, %s22
      %s34 = scalar_select %p31, %s33, %s22
      %p35 = scmp.ge.s32.totalorder %s34, 1
      %s36 = scalar_select %p35, 0, %s34
      %s37 = sadd.s32 1, %s21
      %s38 = scalar_select %p35, %s37, %s21
      %p39 = scmp.ge.s32.totalorder %s38, 2
      %s40 = scalar_select %p39, 0, %s38
      %s41 = ssub.s32 %s21, %s40
      %s42 = ssub.s32 %s22, %s36
      %s43 = sor.u32 %s41, %s42
      %p44 = scmp.eq.s32.totalorder %s43, 0
      %s46 = sadd.s32 %s45, 1
      %s47 = scalar_select %p44, %s45, %s46
      %p50 = pneg %p44
      %p51 = scmp.eq.s32.totalorder %s14, 1
      %p52 = por %p50, %p51
      %p53 = scmp.ne.s32.totalorder %s45, %s48
      %p54 = scmp.eq.s32.totalorder %s14, 0
      %p55 = por %p53, %p54
      %p56 = scmp.ne.s32.totalorder %s45, %s48
      %p57 = scmp.eq.s32.totalorder %s19, 1
      %p58 = por %p56, %p57
      %p59 = scmp.ne.s32.totalorder %s48, %s49
      %p60 = scmp.eq.s32.totalorder %s19, 0
      %p61 = por %p59, %p60
      %p62 = scmp.ne.s32.totalorder %s48, %s49
      %p63 = scmp.eq.s32.totalorder %s20, 1
      %p64 = por %p62, %p63
      %p66 = scmp.ne.s32.totalorder %s49, %s65
      %p67 = scmp.eq.s32.totalorder %s20, 0
      %p68 = por %p66, %p67
      %s69 = ssub.s32 %s21, %s40
      %s70 = ssub.s32 %s23, %s32
      %s71 = sor.u32 %s69, %s70
      %p72 = scmp.eq.s32.totalorder %s71, 0
      %s74 = sadd.s32 %s73, 1
      %s75 = scalar_select %p72, %s73, %s74
      %p78 = pneg %p72
      %p79 = scmp.eq.s32.totalorder %s14, 1
      %p80 = por %p78, %p79
      %p81 = scmp.ne.s32.totalorder %s73, %s76
      %p82 = scmp.eq.s32.totalorder %s14, 0
      %p83 = por %p81, %p82
      %p84 = scmp.ne.s32.totalorder %s73, %s76
      %p85 = scmp.eq.s32.totalorder %s19, 1
      %p86 = por %p84, %p85
      %p87 = scmp.ne.s32.totalorder %s76, %s77
      %p88 = scmp.eq.s32.totalorder %s19, 0
      %p89 = por %p87, %p88
      %p90 = scmp.ne.s32.totalorder %s76, %s77
      %p91 = scmp.eq.s32.totalorder %s20, 1
      %p92 = por %p90, %p91
      %p94 = scmp.ne.s32.totalorder %s77, %s93
      %p95 = scmp.eq.s32.totalorder %s20, 0
      %p96 = por %p94, %p95
      %s97 = ssub.s32 %s21, %s40
      %s98 = ssub.s32 %s23, %s32
      %s99 = sor.u32 %s97, %s98
      %p100 = scmp.eq.s32.totalorder %s99, 0
      %s102 = sadd.s32 %s101, 1
      %s103 = scalar_select %p100, %s101, %s102
      %p106 = pneg %p100
      %p107 = scmp.eq.s32.totalorder %s14, 1
      %p108 = por %p106, %p107
      %p109 = scmp.ne.s32.totalorder %s101, %s104
      %p110 = scmp.eq.s32.totalorder %s14, 0
      %p111 = por %p109, %p110
      %p112 = scmp.ne.s32.totalorder %s101, %s104
      %p113 = scmp.eq.s32.totalorder %s19, 1
      %p114 = por %p112, %p113
      %p115 = scmp.ne.s32.totalorder %s104, %s105
      %p116 = scmp.eq.s32.totalorder %s19, 0
      %p117 = por %p115, %p116
      %p118 = scmp.ne.s32.totalorder %s104, %s105
      %p119 = scmp.eq.s32.totalorder %s20, 1
      %p120 = por %p118, %p119
      %p122 = scmp.ne.s32.totalorder %s105, %s121
      %p123 = scmp.eq.s32.totalorder %s20, 0
      %p124 = por %p122, %p123
      %s126 = sadd.s32 %s125, 1
      %p129 = scmp.eq.s32.totalorder %s14, 1
      %p130 = scmp.ne.s32.totalorder %s125, %s127
      %p131 = scmp.eq.s32.totalorder %s14, 0
      %p132 = por %p130, %p131
      %p133 = scmp.ne.s32.totalorder %s125, %s127
      %p134 = scmp.eq.s32.totalorder %s19, 1
      %p135 = por %p133, %p134
      %p136 = scmp.ne.s32.totalorder %s127, %s128
      %p137 = scmp.eq.s32.totalorder %s19, 0
      %p138 = por %p136, %p137
      %p139 = scmp.ne.s32.totalorder %s127, %s128
      %p140 = scmp.eq.s32.totalorder %s20, 1
      %p141 = por %p139, %p140
      %p143 = scmp.ne.s32.totalorder %s128, %s142
      %p144 = scmp.eq.s32.totalorder %s20, 0
      %p145 = por %p143, %p144
      %s147 = sadd.s32 %s146, 1
      %p150 = scmp.eq.s32.totalorder %s14, 1
      %p151 = scmp.ne.s32.totalorder %s146, %s148
      %p152 = scmp.eq.s32.totalorder %s14, 0
      %p153 = por %p151, %p152
      %p154 = scmp.ne.s32.totalorder %s146, %s148
      %p155 = scmp.eq.s32.totalorder %s19, 1
      %p156 = por %p154, %p155
      %p157 = scmp.ne.s32.totalorder %s148, %s149
      %p158 = scmp.eq.s32.totalorder %s19, 0
      %p159 = por %p157, %p158
      %p160 = scmp.ne.s32.totalorder %s148, %s149
      %p161 = scmp.eq.s32.totalorder %s20, 1
      %p162 = por %p160, %p161
      %p164 = scmp.ne.s32.totalorder %s149, %s163
      %p165 = scmp.eq.s32.totalorder %s20, 0
      %p166 = por %p164, %p165
      %s167 = ssub.s32 %s21, %s40
      %s168 = ssub.s32 %s22, %s36
      %s169 = sor.u32 %s167, %s168
      %p170 = scmp.eq.s32.totalorder %s169, 0
      %s172 = sadd.s32 %s171, 1
      %s173 = scalar_select %p170, %s171, %s172
      %p176 = pneg %p170
      %p177 = scmp.eq.s32.totalorder %s14, 1
      %p178 = por %p176, %p177
      %p179 = scmp.ne.s32.totalorder %s171, %s174
      %p180 = scmp.eq.s32.totalorder %s14, 0
      %p181 = por %p179, %p180
      %p182 = scmp.ne.s32.totalorder %s171, %s174
      %p183 = scmp.eq.s32.totalorder %s19, 1
      %p184 = por %p182, %p183
      %p185 = scmp.ne.s32.totalorder %s174, %s175
      %p186 = scmp.eq.s32.totalorder %s19, 0
      %p187 = por %p185, %p186
      %p188 = scmp.ne.s32.totalorder %s174, %s175
      %p189 = scmp.eq.s32.totalorder %s20, 1
      %p190 = por %p188, %p189
      %p192 = scmp.ne.s32.totalorder %s175, %s191
      %p193 = scmp.eq.s32.totalorder %s20, 0
      %p194 = por %p192, %p193
      %p195 = scmp.le.s32.totalorder 1, %s14
      %p196 = scmp.lt.s32.totalorder %s14, 3
      %p197 = pnand %p195, %p196
      %p198 = pneg %p197
      // Predicated region
      $region9: #{tpu_custom_call.1} parent=5 // pred_check
        _
      $region10: #{tpu_custom_call.1} parent=5 // pred_check_branch
        %200 = sbr.rel (%p197) target = $region12
      $region11: #{tpu_custom_call.1} parent=5 // pred_region
        %s201 = ssub.s32 %s14, 1
        // Predicated region
        $region13: #{tpu_custom_call.1} parent=11 // pred_check
          %p202 = pneg %p138
        $region14: #{tpu_custom_call.1} parent=11 // pred_check_branch
          %204 = sbr.rel (%p202) target = $region16
        $region15: #{tpu_custom_call.1} parent=11 // pred_region
          _
        $region16: #{tpu_custom_call.1} parent=11 // pred_fallthru
          _
        // Predicated region
        $region17: #{tpu_custom_call.1} parent=11 // pred_check
          %p205 = pneg %p159
        $region18: #{tpu_custom_call.1} parent=11 // pred_check_branch
          %207 = sbr.rel (%p205) target = $region20
        $region19: #{tpu_custom_call.1} parent=11 // pred_region
          _
        $region20: #{tpu_custom_call.1} parent=11 // pred_fallthru
          _
      $region12: #{tpu_custom_call.1} parent=5 // pred_fallthru
        _
      %p208 = scmp.lt.s32.totalorder %s14, 2
      // Predicated region
      $region21: #{tpu_custom_call.1} parent=5 // pred_check
        %p209 = pneg %p208
      $region22: #{tpu_custom_call.1} parent=5 // pred_check_branch
        %211 = sbr.rel (%p209) target = $region24
      $region23: #{tpu_custom_call.1} parent=5 // pred_region
        // Predicated region
        $region25: #{tpu_custom_call.1} parent=23 // pred_check
          %p212 = pneg %p55
        $region26: #{tpu_custom_call.1} parent=23 // pred_check_branch
          %214 = sbr.rel (%p212) target = $region28
        $region27: #{tpu_custom_call.1} parent=23 // pred_region
          %p215 = scmp.lt.s32.totalorder %s21, 1
          %s216 = scalar_select %p215, %s21, 1
          %p217 = scmp.lt.s32.totalorder %s22, 0
          %s218 = scalar_select %p217, %s22, 0
          %s219 = smul.addr %s216, 8
          %s220 = sadd.s32 %s218, %s219
          %s221 = smul.addr %s220, 4
          %s222 = scalar_lea.vmem %s0, %s221
        $region28: #{tpu_custom_call.1} parent=23 // pred_fallthru
          _
        // Predicated region
        $region29: #{tpu_custom_call.1} parent=23 // pred_check
          %p223 = pneg %p83
        $region30: #{tpu_custom_call.1} parent=23 // pred_check_branch
          %225 = sbr.rel (%p223) target = $region32
        $region31: #{tpu_custom_call.1} parent=23 // pred_region
          %p226 = scmp.lt.s32.totalorder %s21, 1
          %s227 = scalar_select %p226, %s21, 1
          %p228 = scmp.lt.s32.totalorder %s23, 0
          %s229 = scalar_select %p228, %s23, 0
          %s230 = smul.addr %s227, 8
          %s231 = sadd.s32 %s229, %s230
          %s232 = smul.addr %s231, 4
          %s233 = scalar_lea.vmem %s1, %s232
        $region32: #{tpu_custom_call.1} parent=23 // pred_fallthru
          _
        // Predicated region
        $region33: #{tpu_custom_call.1} parent=23 // pred_check
          %p234 = pneg %p111
        $region34: #{tpu_custom_call.1} parent=23 // pred_check_branch
          %236 = sbr.rel (%p234) target = $region36
        $region35: #{tpu_custom_call.1} parent=23 // pred_region
          %p237 = scmp.lt.s32.totalorder %s21, 1
          %s238 = scalar_select %p237, %s21, 1
          %p239 = scmp.lt.s32.totalorder %s23, 0
          %s240 = scalar_select %p239, %s23, 0
          %s241 = smul.addr %s238, 8
          %s242 = sadd.s32 %s240, %s241
          %s243 = smul.addr %s242, 4
          %s244 = scalar_lea.vmem %s2, %s243
        $region36: #{tpu_custom_call.1} parent=23 // pred_fallthru
          _
      $region24: #{tpu_custom_call.1} parent=5 // pred_fallthru
        _
      %p245 = scmp.le.s32.totalorder 1, %s14
      %p246 = scmp.lt.s32.totalorder %s14, 3
      %p247 = pnand %p245, %p246
      %p248 = pneg %p247
      // Predicated region
      $region37: #{tpu_custom_call.1} parent=5 // pred_check
        _
      $region38: #{tpu_custom_call.1} parent=5 // pred_check_branch
        %250 = sbr.rel (%p247) target = $region40
      $region39: #{tpu_custom_call.1} parent=5 // pred_region
        %s251 = ssub.s32 %s14, 1
        %p252 = scmp.lt.s32.totalorder %s24, 1
        %s253 = scalar_select %p252, %s24, 1
        %p254 = scmp.lt.s32.totalorder %s25, 0
        %s255 = scalar_select %p254, %s25, 0
        %s256 = smul.addr %s253, 8
        %s257 = sadd.s32 %s255, %s256
        %s258 = smul.addr %s257, 4
        %s259 = scalar_lea.vmem %s0, %s258
        %p260 = pneg %p61
        %p261 = pneg %p58
        %p262 = scmp.lt.s32.totalorder %s24, 1
        %s263 = scalar_select %p262, %s24, 1
        %p264 = scmp.lt.s32.totalorder %s26, 0
        %s265 = scalar_select %p264, %s26, 0
        %s266 = smul.addr %s263, 8
        %s267 = sadd.s32 %s265, %s266
        %s268 = smul.addr %s267, 4
        %s269 = scalar_lea.vmem %s1, %s268
        %p270 = pneg %p89
        %p271 = pneg %p86
        %p272 = scmp.lt.s32.totalorder %s24, 1
        %s273 = scalar_select %p272, %s24, 1
        %p274 = scmp.lt.s32.totalorder %s26, 0
        %s275 = scalar_select %p274, %s26, 0
        %s276 = smul.addr %s273, 8
        %s277 = sadd.s32 %s275, %s276
        %s278 = smul.addr %s277, 4
        %s279 = scalar_lea.vmem %s2, %s278
        %p280 = pneg %p117
        %p281 = pneg %p114
        %p282 = pneg %p138
        %p283 = pneg %p135
        %p284 = pneg %p159
        %p285 = pneg %p156
        %p286 = pneg %p187
        %p287 = pneg %p184
        %s288 = sand.u32 %s174, 1
        %s289 = scalar_lea.sflag [#allocation6], %s288
        %s290 = sand.u32 %s174, 1
        %s291 = smul.addr %s290, 8
        %s292 = scalar_lea.vmem [#allocation5], %s291
        %p293 = scmp.lt.s32.totalorder %s24, 1
        %s294 = scalar_select %p293, %s24, 1
        %p295 = scmp.lt.s32.totalorder %s25, 0
        %s296 = scalar_select %p295, %s25, 0
        %s297 = smul.addr %s294, 8
        %s298 = sadd.s32 %s296, %s297
        %s299 = smul.addr %s298, 4
        %s300 = scalar_lea.vmem %s0, %s299
        %p301 = scmp.lt.s32.totalorder %s24, 1
        %s302 = scalar_select %p301, %s24, 1
        %p303 = scmp.lt.s32.totalorder %s26, 0
        %s304 = scalar_select %p303, %s26, 0
        %s305 = smul.addr %s302, 8
        %s306 = sadd.s32 %s304, %s305
        %s307 = smul.addr %s306, 4
        %s308 = scalar_lea.vmem %s1, %s307
        %p309 = scmp.lt.s32.totalorder %s24, 1
        %s310 = scalar_select %p309, %s24, 1
        %p311 = scmp.lt.s32.totalorder %s26, 0
        %s312 = scalar_select %p311, %s26, 0
        %s313 = smul.addr %s310, 8
        %s314 = sadd.s32 %s312, %s313
        %s315 = smul.addr %s314, 4
        %s316 = scalar_lea.vmem %s2, %s315
        %p318 = scmp.eq.s32.totalorder %s26, 0
        // Predicated region
        $region41: #{tpu_custom_call.1} parent=39 // pred_check
          %p319 = pneg %p318
        $region42: #{tpu_custom_call.1} parent=39 // pred_check_branch
          %321 = sbr.rel (%p319) target = $region44
        $region43: #{tpu_custom_call.1} parent=39 // pred_region
          %vm322 = vcmask 7168
          %323 = vst.msk [vmem:[#allocation2] sm:$0xff] %vm322, -inf
          %324 = vst.msk [vmem:[#allocation2 + $0x8] sm:$0xff] %vm322, -inf
          %325 = vst.msk [vmem:[#allocation2 + $0x10] sm:$0xff] %vm322, -inf
          %326 = vst.msk [vmem:[#allocation2 + $0x18] sm:$0xff] %vm322, -inf
          %327 = vst.msk [vmem:[#allocation2 + $0x20] sm:$0xff] %vm322, -inf
          %328 = vst.msk [vmem:[#allocation2 + $0x28] sm:$0xff] %vm322, -inf
          %329 = vst.msk [vmem:[#allocation2 + $0x30] sm:$0xff] %vm322, -inf
          %330 = vst.msk [vmem:[#allocation2 + $0x38] sm:$0xff] %vm322, -inf
          %331 = vst.msk [vmem:[#allocation3] sm:$0xff] %vm322, 0.0
          %332 = vst.msk [vmem:[#allocation3 + $0x8] sm:$0xff] %vm322, 0.0
          %333 = vst.msk [vmem:[#allocation3 + $0x10] sm:$0xff] %vm322, 0.0
          %334 = vst.msk [vmem:[#allocation3 + $0x18] sm:$0xff] %vm322, 0.0
          %335 = vst.msk [vmem:[#allocation3 + $0x20] sm:$0xff] %vm322, 0.0
          %336 = vst.msk [vmem:[#allocation3 + $0x28] sm:$0xff] %vm322, 0.0
          %337 = vst.msk [vmem:[#allocation3 + $0x30] sm:$0xff] %vm322, 0.0
          %338 = vst.msk [vmem:[#allocation3 + $0x38] sm:$0xff] %vm322, 0.0
          %vm339 = vcmask 31744
          %340 = vst.msk [vmem:[#allocation4] sm:$0xff] %vm339, 0.0
          %341 = vst.msk [vmem:[#allocation4 + $0x8] sm:$0xff] %vm339, 0.0
          %342 = vst.msk [vmem:[#allocation4 + $0x10] sm:$0xff] %vm339, 0.0
          %343 = vst.msk [vmem:[#allocation4 + $0x18] sm:$0xff] %vm339, 0.0
          %344 = vst.msk [vmem:[#allocation4 + $0x20] sm:$0xff] %vm339, 0.0
          %345 = vst.msk [vmem:[#allocation4 + $0x28] sm:$0xff] %vm339, 0.0
          %346 = vst.msk [vmem:[#allocation4 + $0x30] sm:$0xff] %vm339, 0.0
          %347 = vst.msk [vmem:[#allocation4 + $0x38] sm:$0xff] %vm339, 0.0
        $region44: #{tpu_custom_call.1} parent=39 // pred_fallthru
          _
        %v348 = vld [vmem:[%s300] sm:$0xf]
        %v349 = vld [vmem:[%s300 + $0x4] sm:$0xf]
        %v350 = vld [vmem:[%s300 + $0x8] sm:$0xf]
        %v351 = vld [vmem:[%s300 + $0xc] sm:$0xf]
        %v352 = vld [vmem:[%s300 + $0x10] sm:$0xf]
        %v353 = vld [vmem:[%s300 + $0x14] sm:$0xf]
        %v354 = vld [vmem:[%s300 + $0x18] sm:$0xf]
        %v355 = vld [vmem:[%s300 + $0x1c] sm:$0xf]
        %v356 = vld [vmem:[%s308] sm:$0xf]
        %v357 = vld [vmem:[%s308 + $0x4] sm:$0xf]
        %v358 = vld [vmem:[%s308 + $0x8] sm:$0xf]
        %v359 = vld [vmem:[%s308 + $0xc] sm:$0xf]
        %v360 = vld [vmem:[%s308 + $0x10] sm:$0xf]
        %v361 = vld [vmem:[%s308 + $0x14] sm:$0xf]
        %v362 = vld [vmem:[%s308 + $0x18] sm:$0xf]
        %v363 = vld [vmem:[%s308 + $0x1c] sm:$0xf]
        %v364 = vld [vmem:[%s316] sm:$0xf]
        %v365 = vld [vmem:[%s316 + $0x4] sm:$0xf]
        %v366 = vld [vmem:[%s316 + $0x8] sm:$0xf]
        %v367 = vld [vmem:[%s316 + $0xc] sm:$0xf]
        %v368 = vld [vmem:[%s316 + $0x10] sm:$0xf]
        %v369 = vld [vmem:[%s316 + $0x14] sm:$0xf]
        %v370 = vld [vmem:[%s316 + $0x18] sm:$0xf]
        %v371 = vld [vmem:[%s316 + $0x1c] sm:$0xf]
        %vm372 = vcmask 31744
        %v374 = vsel %vm372, %v348, 0
        %v377 = vsel %vm372, %v356, 0
        %379 = vmatprep.subr.bf16.mxu0 0
        %380 = vmatpush1.bf16.xpose.msra.mxu0 %v377
        %381 = vmatprep.subr.bf16.mxu0 0
        %382 = vmatpush1.bf16.xpose.msra.mxu0 0
        %383 = vmatprep.subr.bf16.mxu0 0
        %384 = vmatpush1.bf16.xpose.msra.mxu0 0
        %385 = vmatprep.subr.bf16.mxu0 0
        %386 = vmatpush1.bf16.xpose.msra.mxu0 0
        %387 = vmatprep.subr.bf16.mxu0 0
        %388 = vmatpush1.bf16.xpose.msra.mxu0 0
        %389 = vmatprep.subr.bf16.mxu0 0
        %390 = vmatpush1.bf16.xpose.msra.mxu0 0
        %391 = vmatprep.subr.bf16.mxu0 0
        %392 = vmatpush1.bf16.xpose.msra.mxu0 0
        %393 = vmatprep.subr.bf16.mxu0 0
        %394 = vmatpush1.bf16.xpose.msra.mxu0 0
        %395 = vmatprep.subr.bf16.mxu0 0
        %396 = vmatpush1.bf16.xpose.msra.mxu0 0
        %397 = vmatprep.subr.bf16.mxu0 0
        %398 = vmatpush1.bf16.xpose.msra.mxu0 0
        %399 = vmatprep.subr.bf16.mxu0 0
        %400 = vmatpush1.bf16.xpose.msra.mxu0 0
        %401 = vmatprep.subr.bf16.mxu0 0
        %402 = vmatpush1.bf16.xpose.msra.mxu0 0
        %403 = vmatprep.subr.bf16.mxu0 0
        %404 = vmatpush1.bf16.xpose.msra.mxu0 0
        %405 = vmatprep.subr.bf16.mxu0 0
        %406 = vmatpush1.bf16.xpose.msra.mxu0 0
        %407 = vmatprep.subr.bf16.mxu0 0
        %408 = vmatpush1.bf16.xpose.msra.mxu0 0
        %409 = vmatprep.subr.bf16.mxu0 0
        %410 = vmatpush1.bf16.xpose.msra.mxu0 0
        %411 = vmatprep.mubr.bf16.mxu0 0
        %412 = vmatmul.mubr.bf16.gmra.mrb[0].mxu0 %v374
        %v413 = vpop.f32.mrb[0].mxu0
        %v414 = vadd.f32 0.0, %v413
        %v415 = vpop.f32.mrb[0].mxu0
        %v416 = vpop.f32.mrb[0].mxu0
        %v417 = vpop.f32.mrb[0].mxu0
        %418 = vdwg.mxu0
        %v420 = vsel %vm372, %v349, 0
        %v423 = vsel %vm372, %v357, 0
        %425 = vmatprep.subr.bf16.mxu0 0
        %426 = vmatpush1.bf16.xpose.msra.mxu0 %v423
        %427 = vmatprep.subr.bf16.mxu0 0
        %428 = vmatpush1.bf16.xpose.msra.mxu0 0
        %429 = vmatprep.subr.bf16.mxu0 0
        %430 = vmatpush1.bf16.xpose.msra.mxu0 0
        %431 = vmatprep.subr.bf16.mxu0 0
        %432 = vmatpush1.bf16.xpose.msra.mxu0 0
        %433 = vmatprep.subr.bf16.mxu0 0
        %434 = vmatpush1.bf16.xpose.msra.mxu0 0
        %435 = vmatprep.subr.bf16.mxu0 0
        %436 = vmatpush1.bf16.xpose.msra.mxu0 0
        %437 = vmatprep.subr.bf16.mxu0 0
        %438 = vmatpush1.bf16.xpose.msra.mxu0 0
        %439 = vmatprep.subr.bf16.mxu0 0
        %440 = vmatpush1.bf16.xpose.msra.mxu0 0
        %441 = vmatprep.subr.bf16.mxu0 0
        %442 = vmatpush1.bf16.xpose.msra.mxu0 0
        %443 = vmatprep.subr.bf16.mxu0 0
        %444 = vmatpush1.bf16.xpose.msra.mxu0 0
        %445 = vmatprep.subr.bf16.mxu0 0
        %446 = vmatpush1.bf16.xpose.msra.mxu0 0
        %447 = vmatprep.subr.bf16.mxu0 0
        %448 = vmatpush1.bf16.xpose.msra.mxu0 0
        %449 = vmatprep.subr.bf16.mxu0 0
        %450 = vmatpush1.bf16.xpose.msra.mxu0 0
        %451 = vmatprep.subr.bf16.mxu0 0
        %452 = vmatpush1.bf16.xpose.msra.mxu0 0
        %453 = vmatprep.subr.bf16.mxu0 0
        %454 = vmatpush1.bf16.xpose.msra.mxu0 0
        %455 = vmatprep.subr.bf16.mxu0 0
        %456 = vmatpush1.bf16.xpose.msra.mxu0 0
        %457 = vmatprep.mubr.bf16.mxu0 0
        %458 = vmatmul.mubr.bf16.gmra.mrb[0].mxu0 %v420
        %v459 = vpop.f32.mrb[0].mxu0
        %v460 = vadd.f32 0.0, %v459
        %v461 = vpop.f32.mrb[0].mxu0
        %v462 = vpop.f32.mrb[0].mxu0
        %v463 = vpop.f32.mrb[0].mxu0
        %464 = vdwg.mxu0
        %v466 = vsel %vm372, %v350, 0
        %v469 = vsel %vm372, %v358, 0
        %471 = vmatprep.subr.bf16.mxu0 0
        %472 = vmatpush1.bf16.xpose.msra.mxu0 %v469
        %473 = vmatprep.subr.bf16.mxu0 0
        %474 = vmatpush1.bf16.xpose.msra.mxu0 0
        %475 = vmatprep.subr.bf16.mxu0 0
        %476 = vmatpush1.bf16.xpose.msra.mxu0 0
        %477 = vmatprep.subr.bf16.mxu0 0
        %478 = vmatpush1.bf16.xpose.msra.mxu0 0
        %479 = vmatprep.subr.bf16.mxu0 0
        %480 = vmatpush1.bf16.xpose.msra.mxu0 0
        %481 = vmatprep.subr.bf16.mxu0 0
        %482 = vmatpush1.bf16.xpose.msra.mxu0 0
        %483 = vmatprep.subr.bf16.mxu0 0
        %484 = vmatpush1.bf16.xpose.msra.mxu0 0
        %485 = vmatprep.subr.bf16.mxu0 0
        %486 = vmatpush1.bf16.xpose.msra.mxu0 0
        %487 = vmatprep.subr.bf16.mxu0 0
        %488 = vmatpush1.bf16.xpose.msra.mxu0 0
        %489 = vmatprep.subr.bf16.mxu0 0
        %490 = vmatpush1.bf16.xpose.msra.mxu0 0
        %491 = vmatprep.subr.bf16.mxu0 0
        %492 = vmatpush1.bf16.xpose.msra.mxu0 0
        %493 = vmatprep.subr.bf16.mxu0 0
        %494 = vmatpush1.bf16.xpose.msra.mxu0 0
        %495 = vmatprep.subr.bf16.mxu0 0
        %496 = vmatpush1.bf16.xpose.msra.mxu0 0
        %497 = vmatprep.subr.bf16.mxu0 0
        %498 = vmatpush1.bf16.xpose.msra.mxu0 0
        %499 = vmatprep.subr.bf16.mxu0 0
        %500 = vmatpush1.bf16.xpose.msra.mxu0 0
        %501 = vmatprep.subr.bf16.mxu0 0
        %502 = vmatpush1.bf16.xpose.msra.mxu0 0
        %503 = vmatprep.mubr.bf16.mxu0 0
        %504 = vmatmul.mubr.bf16.gmra.mrb[0].mxu0 %v466
        %v505 = vpop.f32.mrb[0].mxu0
        %v506 = vadd.f32 0.0, %v505
        %v507 = vpop.f32.mrb[0].mxu0
        %v508 = vpop.f32.mrb[0].mxu0
        %v509 = vpop.f32.mrb[0].mxu0
        %510 = vdwg.mxu0
        %v512 = vsel %vm372, %v351, 0
        %v515 = vsel %vm372, %v359, 0
        %517 = vmatprep.subr.bf16.mxu0 0
        %518 = vmatpush1.bf16.xpose.msra.mxu0 %v515
        %519 = vmatprep.subr.bf16.mxu0 0
        %520 = vmatpush1.bf16.xpose.msra.mxu0 0
        %521 = vmatprep.subr.bf16.mxu0 0
        %522 = vmatpush1.bf16.xpose.msra.mxu0 0
        %523 = vmatprep.subr.bf16.mxu0 0
        %524 = vmatpush1.bf16.xpose.msra.mxu0 0
        %525 = vmatprep.subr.bf16.mxu0 0
        %526 = vmatpush1.bf16.xpose.msra.mxu0 0
        %527 = vmatprep.subr.bf16.mxu0 0
        %528 = vmatpush1.bf16.xpose.msra.mxu0 0
        %529 = vmatprep.subr.bf16.mxu0 0
        %530 = vmatpush1.bf16.xpose.msra.mxu0 0
        %531 = vmatprep.subr.bf16.mxu0 0
        %532 = vmatpush1.bf16.xpose.msra.mxu0 0
        %533 = vmatprep.subr.bf16.mxu0 0
        %534 = vmatpush1.bf16.xpose.msra.mxu0 0
        %535 = vmatprep.subr.bf16.mxu0 0
        %536 = vmatpush1.bf16.xpose.msra.mxu0 0
        %537 = vmatprep.subr.bf16.mxu0 0
        %538 = vmatpush1.bf16.xpose.msra.mxu0 0
        %539 = vmatprep.subr.bf16.mxu0 0
        %540 = vmatpush1.bf16.xpose.msra.mxu0 0
        %541 = vmatprep.subr.bf16.mxu0 0
        %542 = vmatpush1.bf16.xpose.msra.mxu0 0
        %543 = vmatprep.subr.bf16.mxu0 0
        %544 = vmatpush1.bf16.xpose.msra.mxu0 0
        %545 = vmatprep.subr.bf16.mxu0 0
        %546 = vmatpush1.bf16.xpose.msra.mxu0 0
        %547 = vmatprep.subr.bf16.mxu0 0
        %548 = vmatpush1.bf16.xpose.msra.mxu0 0
        %549 = vmatprep.mubr.bf16.mxu0 0
        %550 = vmatmul.mubr.bf16.gmra.mrb[0].mxu0 %v512
        %v551 = vpop.f32.mrb[0].mxu0
        %v552 = vadd.f32 0.0, %v551
        %v553 = vpop.f32.mrb[0].mxu0
        %v554 = vpop.f32.mrb[0].mxu0
        %v555 = vpop.f32.mrb[0].mxu0
        %556 = vdwg.mxu0
        %v558 = vsel %vm372, %v352, 0
        %v561 = vsel %vm372, %v360, 0
        %563 = vmatprep.subr.bf16.mxu0 0
        %564 = vmatpush1.bf16.xpose.msra.mxu0 %v561
        %565 = vmatprep.subr.bf16.mxu0 0
        %566 = vmatpush1.bf16.xpose.msra.mxu0 0
        %567 = vmatprep.subr.bf16.mxu0 0
        %568 = vmatpush1.bf16.xpose.msra.mxu0 0
        %569 = vmatprep.subr.bf16.mxu0 0
        %570 = vmatpush1.bf16.xpose.msra.mxu0 0
        %571 = vmatprep.subr.bf16.mxu0 0
        %572 = vmatpush1.bf16.xpose.msra.mxu0 0
        %573 = vmatprep.subr.bf16.mxu0 0
        %574 = vmatpush1.bf16.xpose.msra.mxu0 0
        %575 = vmatprep.subr.bf16.mxu0 0
        %576 = vmatpush1.bf16.xpose.msra.mxu0 0
        %577 = vmatprep.subr.bf16.mxu0 0
        %578 = vmatpush1.bf16.xpose.msra.mxu0 0
        %579 = vmatprep.subr.bf16.mxu0 0
        %580 = vmatpush1.bf16.xpose.msra.mxu0 0
        %581 = vmatprep.subr.bf16.mxu0 0
        %582 = vmatpush1.bf16.xpose.msra.mxu0 0
        %583 = vmatprep.subr.bf16.mxu0 0
        %584 = vmatpush1.bf16.xpose.msra.mxu0 0
        %585 = vmatprep.subr.bf16.mxu0 0
        %586 = vmatpush1.bf16.xpose.msra.mxu0 0
        %587 = vmatprep.subr.bf16.mxu0 0
        %588 = vmatpush1.bf16.xpose.msra.mxu0 0
        %589 = vmatprep.subr.bf16.mxu0 0
        %590 = vmatpush1.bf16.xpose.msra.mxu0 0
        %591 = vmatprep.subr.bf16.mxu0 0
        %592 = vmatpush1.bf16.xpose.msra.mxu0 0
        %593 = vmatprep.subr.bf16.mxu0 0
        %594 = vmatpush1.bf16.xpose.msra.mxu0 0
        %595 = vmatprep.mubr.bf16.mxu0 0
        %596 = vmatmul.mubr.bf16.gmra.mrb[0].mxu0 %v558
        %v597 = vpop.f32.mrb[0].mxu0
        %v598 = vadd.f32 0.0, %v597
        %v599 = vpop.f32.mrb[0].mxu0
        %v600 = vpop.f32.mrb[0].mxu0
        %v601 = vpop.f32.mrb[0].mxu0
        %602 = vdwg.mxu0
        %v604 = vsel %vm372, %v353, 0
        %v607 = vsel %vm372, %v361, 0
        %609 = vmatprep.subr.bf16.mxu0 0
        %610 = vmatpush1.bf16.xpose.msra.mxu0 %v607
        %611 = vmatprep.subr.bf16.mxu0 0
        %612 = vmatpush1.bf16.xpose.msra.mxu0 0
        %613 = vmatprep.subr.bf16.mxu0 0
        %614 = vmatpush1.bf16.xpose.msra.mxu0 0
        %615 = vmatprep.subr.bf16.mxu0 0
        %616 = vmatpush1.bf16.xpose.msra.mxu0 0
        %617 = vmatprep.subr.bf16.mxu0 0
        %618 = vmatpush1.bf16.xpose.msra.mxu0 0
        %619 = vmatprep.subr.bf16.mxu0 0
        %620 = vmatpush1.bf16.xpose.msra.mxu0 0
        %621 = vmatprep.subr.bf16.mxu0 0
        %622 = vmatpush1.bf16.xpose.msra.mxu0 0
        %623 = vmatprep.subr.bf16.mxu0 0
        %624 = vmatpush1.bf16.xpose.msra.mxu0 0
        %625 = vmatprep.subr.bf16.mxu0 0
        %626 = vmatpush1.bf16.xpose.msra.mxu0 0
        %627 = vmatprep.subr.bf16.mxu0 0
        %628 = vmatpush1.bf16.xpose.msra.mxu0 0
        %629 = vmatprep.subr.bf16.mxu0 0
        %630 = vmatpush1.bf16.xpose.msra.mxu0 0
        %631 = vmatprep.subr.bf16.mxu0 0
        %632 = vmatpush1.bf16.xpose.msra.mxu0 0
        %633 = vmatprep.subr.bf16.mxu0 0
        %634 = vmatpush1.bf16.xpose.msra.mxu0 0
        %635 = vmatprep.subr.bf16.mxu0 0
        %636 = vmatpush1.bf16.xpose.msra.mxu0 0
        %637 = vmatprep.subr.bf16.mxu0 0
        %638 = vmatpush1.bf16.xpose.msra.mxu0 0
        %639 = vmatprep.subr.bf16.mxu0 0
        %640 = vmatpush1.bf16.xpose.msra.mxu0 0
        %641 = vmatprep.mubr.bf16.mxu0 0
        %642 = vmatmul.mubr.bf16.gmra.mrb[0].mxu0 %v604
        %v643 = vpop.f32.mrb[0].mxu0
        %v644 = vadd.f32 0.0, %v643
        %v645 = vpop.f32.mrb[0].mxu0
        %v646 = vpop.f32.mrb[0].mxu0
        %v647 = vpop.f32.mrb[0].mxu0
        %648 = vdwg.mxu0
        %v650 = vsel %vm372, %v354, 0
        %v653 = vsel %vm372, %v362, 0
        %655 = vmatprep.subr.bf16.mxu0 0
        %656 = vmatpush1.bf16.xpose.msra.mxu0 %v653
        %657 = vmatprep.subr.bf16.mxu0 0
        %658 = vmatpush1.bf16.xpose.msra.mxu0 0
        %659 = vmatprep.subr.bf16.mxu0 0
        %660 = vmatpush1.bf16.xpose.msra.mxu0 0
        %661 = vmatprep.subr.bf16.mxu0 0
        %662 = vmatpush1.bf16.xpose.msra.mxu0 0
        %663 = vmatprep.subr.bf16.mxu0 0
        %664 = vmatpush1.bf16.xpose.msra.mxu0 0
        %665 = vmatprep.subr.bf16.mxu0 0
        %666 = vmatpush1.bf16.xpose.msra.mxu0 0
        %667 = vmatprep.subr.bf16.mxu0 0
        %668 = vmatpush1.bf16.xpose.msra.mxu0 0
        %669 = vmatprep.subr.bf16.mxu0 0
        %670 = vmatpush1.bf16.xpose.msra.mxu0 0
        %671 = vmatprep.subr.bf16.mxu0 0
        %672 = vmatpush1.bf16.xpose.msra.mxu0 0
        %673 = vmatprep.subr.bf16.mxu0 0
        %674 = vmatpush1.bf16.xpose.msra.mxu0 0
        %675 = vmatprep.subr.bf16.mxu0 0
        %676 = vmatpush1.bf16.xpose.msra.mxu0 0
        %677 = vmatprep.subr.bf16.mxu0 0
        %678 = vmatpush1.bf16.xpose.msra.mxu0 0
        %679 = vmatprep.subr.bf16.mxu0 0
        %680 = vmatpush1.bf16.xpose.msra.mxu0 0
        %681 = vmatprep.subr.bf16.mxu0 0
        %682 = vmatpush1.bf16.xpose.msra.mxu0 0
        %683 = vmatprep.subr.bf16.mxu0 0
        %684 = vmatpush1.bf16.xpose.msra.mxu0 0
        %685 = vmatprep.subr.bf16.mxu0 0
        %686 = vmatpush1.bf16.xpose.msra.mxu0 0
        %687 = vmatprep.mubr.bf16.mxu0 0
        %688 = vmatmul.mubr.bf16.gmra.mrb[0].mxu0 %v650
        %v689 = vpop.f32.mrb[0].mxu0
        %v690 = vadd.f32 0.0, %v689
        %v691 = vpop.f32.mrb[0].mxu0
        %v692 = vpop.f32.mrb[0].mxu0
        %v693 = vpop.f32.mrb[0].mxu0
        %694 = vdwg.mxu0
        %v696 = vsel %vm372, %v355, 0
        %v699 = vsel %vm372, %v363, 0
        %701 = vmatprep.subr.bf16.mxu0 0
        %702 = vmatpush1.bf16.xpose.msra.mxu0 %v699
        %703 = vmatprep.subr.bf16.mxu0 0
        %704 = vmatpush1.bf16.xpose.msra.mxu0 0
        %705 = vmatprep.subr.bf16.mxu0 0
        %706 = vmatpush1.bf16.xpose.msra.mxu0 0
        %707 = vmatprep.subr.bf16.mxu0 0
        %708 = vmatpush1.bf16.xpose.msra.mxu0 0
        %709 = vmatprep.subr.bf16.mxu0 0
        %710 = vmatpush1.bf16.xpose.msra.mxu0 0
        %711 = vmatprep.subr.bf16.mxu0 0
        %712 = vmatpush1.bf16.xpose.msra.mxu0 0
        %713 = vmatprep.subr.bf16.mxu0 0
        %714 = vmatpush1.bf16.xpose.msra.mxu0 0
        %715 = vmatprep.subr.bf16.mxu0 0
        %716 = vmatpush1.bf16.xpose.msra.mxu0 0
        %717 = vmatprep.subr.bf16.mxu0 0
        %718 = vmatpush1.bf16.xpose.msra.mxu0 0
        %719 = vmatprep.subr.bf16.mxu0 0
        %720 = vmatpush1.bf16.xpose.msra.mxu0 0
        %721 = vmatprep.subr.bf16.mxu0 0
        %722 = vmatpush1.bf16.xpose.msra.mxu0 0
        %723 = vmatprep.subr.bf16.mxu0 0
        %724 = vmatpush1.bf16.xpose.msra.mxu0 0
        %725 = vmatprep.subr.bf16.mxu0 0
        %726 = vmatpush1.bf16.xpose.msra.mxu0 0
        %727 = vmatprep.subr.bf16.mxu0 0
        %728 = vmatpush1.bf16.xpose.msra.mxu0 0
        %729 = vmatprep.subr.bf16.mxu0 0
        %730 = vmatpush1.bf16.xpose.msra.mxu0 0
        %731 = vmatprep.subr.bf16.mxu0 0
        %732 = vmatpush1.bf16.xpose.msra.mxu0 0
        %733 = vmatprep.mubr.bf16.mxu0 0
        %734 = vmatmul.mubr.bf16.gmra.mrb[0].mxu0 %v696
        %v735 = vpop.f32.mrb[0].mxu0
        %v736 = vadd.f32 0.0, %v735
        %v737 = vpop.f32.mrb[0].mxu0
        %v738 = vpop.f32.mrb[0].mxu0
        %v739 = vpop.f32.mrb[0].mxu0
        %740 = vdwg.mxu0
        %v741 = vld [vmem:[#allocation2] sm:$0xff]
        %v742 = vld [vmem:[#allocation2 + $0x8] sm:$0xff]
        %v743 = vld [vmem:[#allocation2 + $0x10] sm:$0xff]
        %v744 = vld [vmem:[#allocation2 + $0x18] sm:$0xff]
        %v745 = vld [vmem:[#allocation2 + $0x20] sm:$0xff]
        %v746 = vld [vmem:[#allocation2 + $0x28] sm:$0xff]
        %v747 = vld [vmem:[#allocation2 + $0x30] sm:$0xff]
        %v748 = vld [vmem:[#allocation2 + $0x38] sm:$0xff]
        %vm749 = vcmask 64512
        %v750 = vsel %vm749, %v414, -inf
        %751 = vmax.xlane.f32.xlu0 %v750
        %v752 = vpop.xlane.xlu0 %751
        %v753 = vsel %vm749, %v460, -inf
        %754 = vmax.xlane.f32.xlu0 %v753
        %v755 = vpop.xlane.xlu0 %754
        %v756 = vsel %vm749, %v506, -inf
        %757 = vmax.xlane.f32.xlu0 %v756
        %v758 = vpop.xlane.xlu0 %757
        %v759 = vsel %vm749, %v552, -inf
        %760 = vmax.xlane.f32.xlu0 %v759
        %v761 = vpop.xlane.xlu0 %760
        %v762 = vsel %vm749, %v598, -inf
        %763 = vmax.xlane.f32.xlu0 %v762
        %v764 = vpop.xlane.xlu0 %763
        %v765 = vsel %vm749, %v644, -inf
        %766 = vmax.xlane.f32.xlu0 %v765
        %v767 = vpop.xlane.xlu0 %766
        %v768 = vsel %vm749, %v690, -inf
        %769 = vmax.xlane.f32.xlu0 %v768
        %v770 = vpop.xlane.xlu0 %769
        %v771 = vsel %vm749, %v736, -inf
        %772 = vmax.xlane.f32.xlu0 %v771
        %v773 = vpop.xlane.xlu0 %772
        %v774 = vmax.f32 %v741, %v752
        %v775 = vmax.f32 %v742, %v755
        %v776 = vmax.f32 %v743, %v758
        %v777 = vmax.f32 %v744, %v761
        %v778 = vmax.f32 %v745, %v764
        %v779 = vmax.f32 %v746, %v767
        %v780 = vmax.f32 %v747, %v770
        %v781 = vmax.f32 %v748, %v773
        %v782 = vsub.f32 %v741, %v774
        %v783 = vsub.f32 %v742, %v775
        %v784 = vsub.f32 %v743, %v776
        %v785 = vsub.f32 %v744, %v777
        %v786 = vsub.f32 %v745, %v778
        %v787 = vsub.f32 %v746, %v779
        %v788 = vsub.f32 %v747, %v780
        %v789 = vsub.f32 %v748, %v781
        %v790 = vmul.f32 %v782, 1.442695
        %v791 = vpow.pop %v790
        %v792 = vmul.f32 %v783, 1.442695
        %v793 = vpow.pop %v792
        %v794 = vmul.f32 %v784, 1.442695
        %v795 = vpow.pop %v794
        %v796 = vmul.f32 %v785, 1.442695
        %v797 = vpow.pop %v796
        %v798 = vmul.f32 %v786, 1.442695
        %v799 = vpow.pop %v798
        %v800 = vmul.f32 %v787, 1.442695
        %v801 = vpow.pop %v800
        %v802 = vmul.f32 %v788, 1.442695
        %v803 = vpow.pop %v802
        %v804 = vmul.f32 %v789, 1.442695
        %v805 = vpow.pop %v804
        %807 = vset.pattern.permute.xlu0 0
        %808 = vperm.xlu0 %807, %v774
        %v809 = vpop.permute.xlu0 %808
        %812 = vset.pattern.permute.xlu0 0
        %813 = vperm.xlu0 %812, %v775
        %v814 = vpop.permute.xlu0 %813
        %817 = vset.pattern.permute.xlu0 0
        %818 = vperm.xlu0 %817, %v776
        %v819 = vpop.permute.xlu0 %818
        %822 = vset.pattern.permute.xlu0 0
        %823 = vperm.xlu0 %822, %v777
        %v824 = vpop.permute.xlu0 %823
        %827 = vset.pattern.permute.xlu0 0
        %828 = vperm.xlu0 %827, %v778
        %v829 = vpop.permute.xlu0 %828
        %832 = vset.pattern.permute.xlu0 0
        %833 = vperm.xlu0 %832, %v779
        %v834 = vpop.permute.xlu0 %833
        %837 = vset.pattern.permute.xlu0 0
        %838 = vperm.xlu0 %837, %v780
        %v839 = vpop.permute.xlu0 %838
        %842 = vset.pattern.permute.xlu0 0
        %843 = vperm.xlu0 %842, %v781
        %v844 = vpop.permute.xlu0 %843
        %v846 = vsub.f32 %v414, %v809
        %v847 = vsub.f32 %v460, %v814
        %v848 = vsub.f32 %v506, %v819
        %v849 = vsub.f32 %v552, %v824
        %v850 = vsub.f32 %v598, %v829
        %v851 = vsub.f32 %v644, %v834
        %v852 = vsub.f32 %v690, %v839
        %v853 = vsub.f32 %v736, %v844
        %v854 = vmul.f32 %v846, 1.442695
        %v855 = vpow.pop %v854
        %v856 = vmul.f32 %v847, 1.442695
        %v857 = vpow.pop %v856
        %v858 = vmul.f32 %v848, 1.442695
        %v859 = vpow.pop %v858
        %v860 = vmul.f32 %v849, 1.442695
        %v861 = vpow.pop %v860
        %v862 = vmul.f32 %v850, 1.442695
        %v863 = vpow.pop %v862
        %v864 = vmul.f32 %v851, 1.442695
        %v865 = vpow.pop %v864
        %v866 = vmul.f32 %v852, 1.442695
        %v867 = vpow.pop %v866
        %v868 = vmul.f32 %v853, 1.442695
        %v869 = vpow.pop %v868
        %v870 = vld [vmem:[#allocation3] sm:$0xff]
        %v871 = vld [vmem:[#allocation3 + $0x8] sm:$0xff]
        %v872 = vld [vmem:[#allocation3 + $0x10] sm:$0xff]
        %v873 = vld [vmem:[#allocation3 + $0x18] sm:$0xff]
        %v874 = vld [vmem:[#allocation3 + $0x20] sm:$0xff]
        %v875 = vld [vmem:[#allocation3 + $0x28] sm:$0xff]
        %v876 = vld [vmem:[#allocation3 + $0x30] sm:$0xff]
        %v877 = vld [vmem:[#allocation3 + $0x38] sm:$0xff]
        %v878 = vmul.f32 %v791, %v870
        %v879 = vmul.f32 %v793, %v871
        %v880 = vmul.f32 %v795, %v872
        %v881 = vmul.f32 %v797, %v873
        %v882 = vmul.f32 %v799, %v874
        %v883 = vmul.f32 %v801, %v875
        %v884 = vmul.f32 %v803, %v876
        %v885 = vmul.f32 %v805, %v877
        %v886 = vsel %vm749, %v855, 0.0
        %887 = vadd.xlane.f32.xlu0 %v886
        %v888 = vpop.xlane.xlu0 %887
        %v889 = vsel %vm749, %v857, 0.0
        %890 = vadd.xlane.f32.xlu0 %v889
        %v891 = vpop.xlane.xlu0 %890
        %v892 = vsel %vm749, %v859, 0.0
        %893 = vadd.xlane.f32.xlu0 %v892
        %v894 = vpop.xlane.xlu0 %893
        %v895 = vsel %vm749, %v861, 0.0
        %896 = vadd.xlane.f32.xlu0 %v895
        %v897 = vpop.xlane.xlu0 %896
        %v898 = vsel %vm749, %v863, 0.0
        %899 = vadd.xlane.f32.xlu0 %v898
        %v900 = vpop.xlane.xlu0 %899
        %v901 = vsel %vm749, %v865, 0.0
        %902 = vadd.xlane.f32.xlu0 %v901
        %v903 = vpop.xlane.xlu0 %902
        %v904 = vsel %vm749, %v867, 0.0
        %905 = vadd.xlane.f32.xlu0 %v904
        %v906 = vpop.xlane.xlu0 %905
        %v907 = vsel %vm749, %v869, 0.0
        %908 = vadd.xlane.f32.xlu0 %v907
        %v909 = vpop.xlane.xlu0 %908
        %v910 = vadd.f32 %v878, %v888
        %v911 = vadd.f32 %v879, %v891
        %v912 = vadd.f32 %v880, %v894
        %v913 = vadd.f32 %v881, %v897
        %v914 = vadd.f32 %v882, %v900
        %v915 = vadd.f32 %v883, %v903
        %v916 = vadd.f32 %v884, %v906
        %v917 = vadd.f32 %v885, %v909
        %vm918 = vcmask 7168
        %919 = vst.msk [vmem:[#allocation3] sm:$0xff] %vm918, %v910
        %920 = vst.msk [vmem:[#allocation3 + $0x8] sm:$0xff] %vm918, %v911
        %921 = vst.msk [vmem:[#allocation3 + $0x10] sm:$0xff] %vm918, %v912
        %922 = vst.msk [vmem:[#allocation3 + $0x18] sm:$0xff] %vm918, %v913
        %923 = vst.msk [vmem:[#allocation3 + $0x20] sm:$0xff] %vm918, %v914
        %924 = vst.msk [vmem:[#allocation3 + $0x28] sm:$0xff] %vm918, %v915
        %925 = vst.msk [vmem:[#allocation3 + $0x30] sm:$0xff] %vm918, %v916
        %926 = vst.msk [vmem:[#allocation3 + $0x38] sm:$0xff] %vm918, %v917
        %v927 = vld [vmem:[#allocation4] sm:$0xff]
        %v928 = vld [vmem:[#allocation4 + $0x8] sm:$0xff]
        %v929 = vld [vmem:[#allocation4 + $0x10] sm:$0xff]
        %v930 = vld [vmem:[#allocation4 + $0x18] sm:$0xff]
        %v931 = vld [vmem:[#allocation4 + $0x20] sm:$0xff]
        %v932 = vld [vmem:[#allocation4 + $0x28] sm:$0xff]
        %v933 = vld [vmem:[#allocation4 + $0x30] sm:$0xff]
        %v934 = vld [vmem:[#allocation4 + $0x38] sm:$0xff]
        %936 = vset.pattern.permute.xlu0 0
        %937 = vperm.xlu0 %936, %v791
        %v938 = vpop.permute.xlu0 %937
        %941 = vset.pattern.permute.xlu0 0
        %942 = vperm.xlu0 %941, %v793
        %v943 = vpop.permute.xlu0 %942
        %946 = vset.pattern.permute.xlu0 0
        %947 = vperm.xlu0 %946, %v795
        %v948 = vpop.permute.xlu0 %947
        %951 = vset.pattern.permute.xlu0 0
        %952 = vperm.xlu0 %951, %v797
        %v953 = vpop.permute.xlu0 %952
        %956 = vset.pattern.permute.xlu0 0
        %957 = vperm.xlu0 %956, %v799
        %v958 = vpop.permute.xlu0 %957
        %961 = vset.pattern.permute.xlu0 0
        %962 = vperm.xlu0 %961, %v801
        %v963 = vpop.permute.xlu0 %962
        %966 = vset.pattern.permute.xlu0 0
        %967 = vperm.xlu0 %966, %v803
        %v968 = vpop.permute.xlu0 %967
        %971 = vset.pattern.permute.xlu0 0
        %972 = vperm.xlu0 %971, %v805
        %v973 = vpop.permute.xlu0 %972
        %v975 = vmul.f32 %v938, %v927
        %v976 = vmul.f32 %v943, %v928
        %v977 = vmul.f32 %v948, %v929
        %v978 = vmul.f32 %v953, %v930
        %v979 = vmul.f32 %v958, %v931
        %v980 = vmul.f32 %v963, %v932
        %v981 = vmul.f32 %v968, %v933
        %v982 = vmul.f32 %v973, %v934
        %v983 = vpack.c.bf16 %v855, %v855
        %v984 = vpack.c.bf16 %v857, %v857
        %v985 = vpack.c.bf16 %v859, %v859
        %v986 = vpack.c.bf16 %v861, %v861
        %v987 = vpack.c.bf16 %v863, %v863
        %v988 = vpack.c.bf16 %v865, %v865
        %v989 = vpack.c.bf16 %v867, %v867
        %v990 = vpack.c.bf16 %v869, %v869
        %v992 = vsel %vm749, %v983, 0
        %vm994 = vcmask 1043456
        %v996 = vsel %vm994, %v364, 0
        %998 = vmatprep.subr.bf16.mxu0 0
        %999 = vmatpush1.bf16.msra.mxu0 %v996
        %1000 = vmatprep.subr.bf16.mxu0 0
        %1001 = vmatpush1.bf16.msra.mxu0 0
        %1002 = vmatprep.subr.bf16.mxu0 0
        %1003 = vmatpush1.bf16.msra.mxu0 0
        %1004 = vmatprep.subr.bf16.mxu0 0
        %1005 = vmatpush1.bf16.msra.mxu0 0
        %1006 = vmatprep.subr.bf16.mxu0 0
        %1007 = vmatpush1.bf16.msra.mxu0 0
        %1008 = vmatprep.subr.bf16.mxu0 0
        %1009 = vmatpush1.bf16.msra.mxu0 0
        %1010 = vmatprep.subr.bf16.mxu0 0
        %1011 = vmatpush1.bf16.msra.mxu0 0
        %1012 = vmatprep.subr.bf16.mxu0 0
        %1013 = vmatpush1.bf16.msra.mxu0 0
        %1014 = vmatprep.subr.bf16.mxu0 0
        %1015 = vmatpush1.bf16.msra.mxu0 0
        %1016 = vmatprep.subr.bf16.mxu0 0
        %1017 = vmatpush1.bf16.msra.mxu0 0
        %1018 = vmatprep.subr.bf16.mxu0 0
        %1019 = vmatpush1.bf16.msra.mxu0 0
        %1020 = vmatprep.subr.bf16.mxu0 0
        %1021 = vmatpush1.bf16.msra.mxu0 0
        %1022 = vmatprep.subr.bf16.mxu0 0
        %1023 = vmatpush1.bf16.msra.mxu0 0
        %1024 = vmatprep.subr.bf16.mxu0 0
        %1025 = vmatpush1.bf16.msra.mxu0 0
        %1026 = vmatprep.subr.bf16.mxu0 0
        %1027 = vmatpush1.bf16.msra.mxu0 0
        %1028 = vmatprep.subr.bf16.mxu0 0
        %1029 = vmatpush1.bf16.msra.mxu0 0
        %1030 = vmatprep.mubr.bf16.mxu0 0
        %1031 = vmatmul.mubr.bf16.gmra.mrb[0].mxu0 %v992
        %v1032 = vpop.f32.mrb[0].mxu0
        %v1033 = vadd.f32 0.0, %v1032
        %v1034 = vpop.f32.mrb[0].mxu0
        %v1035 = vpop.f32.mrb[0].mxu0
        %v1036 = vpop.f32.mrb[0].mxu0
        %1037 = vdwg.mxu0
        %v1039 = vsel %vm749, %v984, 0
        %v1042 = vsel %vm994, %v365, 0
        %1044 = vmatprep.subr.bf16.mxu0 0
        %1045 = vmatpush1.bf16.msra.mxu0 %v1042
        %1046 = vmatprep.subr.bf16.mxu0 0
        %1047 = vmatpush1.bf16.msra.mxu0 0
        %1048 = vmatprep.subr.bf16.mxu0 0
        %1049 = vmatpush1.bf16.msra.mxu0 0
        %1050 = vmatprep.subr.bf16.mxu0 0
        %1051 = vmatpush1.bf16.msra.mxu0 0
        %1052 = vmatprep.subr.bf16.mxu0 0
        %1053 = vmatpush1.bf16.msra.mxu0 0
        %1054 = vmatprep.subr.bf16.mxu0 0
        %1055 = vmatpush1.bf16.msra.mxu0 0
        %1056 = vmatprep.subr.bf16.mxu0 0
        %1057 = vmatpush1.bf16.msra.mxu0 0
        %1058 = vmatprep.subr.bf16.mxu0 0
        %1059 = vmatpush1.bf16.msra.mxu0 0
        %1060 = vmatprep.subr.bf16.mxu0 0
        %1061 = vmatpush1.bf16.msra.mxu0 0
        %1062 = vmatprep.subr.bf16.mxu0 0
        %1063 = vmatpush1.bf16.msra.mxu0 0
        %1064 = vmatprep.subr.bf16.mxu0 0
        %1065 = vmatpush1.bf16.msra.mxu0 0
        %1066 = vmatprep.subr.bf16.mxu0 0
        %1067 = vmatpush1.bf16.msra.mxu0 0
        %1068 = vmatprep.subr.bf16.mxu0 0
        %1069 = vmatpush1.bf16.msra.mxu0 0
        %1070 = vmatprep.subr.bf16.mxu0 0
        %1071 = vmatpush1.bf16.msra.mxu0 0
        %1072 = vmatprep.subr.bf16.mxu0 0
        %1073 = vmatpush1.bf16.msra.mxu0 0
        %1074 = vmatprep.subr.bf16.mxu0 0
        %1075 = vmatpush1.bf16.msra.mxu0 0
        %1076 = vmatprep.mubr.bf16.mxu0 0
        %1077 = vmatmul.mubr.bf16.gmra.mrb[0].mxu0 %v1039
        %v1078 = vpop.f32.mrb[0].mxu0
        %v1079 = vadd.f32 0.0, %v1078
        %v1080 = vpop.f32.mrb[0].mxu0
        %v1081 = vpop.f32.mrb[0].mxu0
        %v1082 = vpop.f32.mrb[0].mxu0
        %1083 = vdwg.mxu0
        %v1085 = vsel %vm749, %v985, 0
        %v1088 = vsel %vm994, %v366, 0
        %1090 = vmatprep.subr.bf16.mxu0 0
        %1091 = vmatpush1.bf16.msra.mxu0 %v1088
        %1092 = vmatprep.subr.bf16.mxu0 0
        %1093 = vmatpush1.bf16.msra.mxu0 0
        %1094 = vmatprep.subr.bf16.mxu0 0
        %1095 = vmatpush1.bf16.msra.mxu0 0
        %1096 = vmatprep.subr.bf16.mxu0 0
        %1097 = vmatpush1.bf16.msra.mxu0 0
        %1098 = vmatprep.subr.bf16.mxu0 0
        %1099 = vmatpush1.bf16.msra.mxu0 0
        %1100 = vmatprep.subr.bf16.mxu0 0
        %1101 = vmatpush1.bf16.msra.mxu0 0
        %1102 = vmatprep.subr.bf16.mxu0 0
        %1103 = vmatpush1.bf16.msra.mxu0 0
        %1104 = vmatprep.subr.bf16.mxu0 0
        %1105 = vmatpush1.bf16.msra.mxu0 0
        %1106 = vmatprep.subr.bf16.mxu0 0
        %1107 = vmatpush1.bf16.msra.mxu0 0
        %1108 = vmatprep.subr.bf16.mxu0 0
        %1109 = vmatpush1.bf16.msra.mxu0 0
        %1110 = vmatprep.subr.bf16.mxu0 0
        %1111 = vmatpush1.bf16.msra.mxu0 0
        %1112 = vmatprep.subr.bf16.mxu0 0
        %1113 = vmatpush1.bf16.msra.mxu0 0
        %1114 = vmatprep.subr.bf16.mxu0 0
        %1115 = vmatpush1.bf16.msra.mxu0 0
        %1116 = vmatprep.subr.bf16.mxu0 0
        %1117 = vmatpush1.bf16.msra.mxu0 0
        %1118 = vmatprep.subr.bf16.mxu0 0
        %1119 = vmatpush1.bf16.msra.mxu0 0
        %1120 = vmatprep.subr.bf16.mxu0 0
        %1121 = vmatpush1.bf16.msra.mxu0 0
        %1122 = vmatprep.mubr.bf16.mxu0 0
        %1123 = vmatmul.mubr.bf16.gmra.mrb[0].mxu0 %v1085
        %v1124 = vpop.f32.mrb[0].mxu0
        %v1125 = vadd.f32 0.0, %v1124
        %v1126 = vpop.f32.mrb[0].mxu0
        %v1127 = vpop.f32.mrb[0].mxu0
        %v1128 = vpop.f32.mrb[0].mxu0
        %1129 = vdwg.mxu0
        %v1131 = vsel %vm749, %v986, 0
        %v1134 = vsel %vm994, %v367, 0
        %1136 = vmatprep.subr.bf16.mxu0 0
        %1137 = vmatpush1.bf16.msra.mxu0 %v1134
        %1138 = vmatprep.subr.bf16.mxu0 0
        %1139 = vmatpush1.bf16.msra.mxu0 0
        %1140 = vmatprep.subr.bf16.mxu0 0
        %1141 = vmatpush1.bf16.msra.mxu0 0
        %1142 = vmatprep.subr.bf16.mxu0 0
        %1143 = vmatpush1.bf16.msra.mxu0 0
        %1144 = vmatprep.subr.bf16.mxu0 0
        %1145 = vmatpush1.bf16.msra.mxu0 0
        %1146 = vmatprep.subr.bf16.mxu0 0
        %1147 = vmatpush1.bf16.msra.mxu0 0
        %1148 = vmatprep.subr.bf16.mxu0 0
        %1149 = vmatpush1.bf16.msra.mxu0 0
        %1150 = vmatprep.subr.bf16.mxu0 0
        %1151 = vmatpush1.bf16.msra.mxu0 0
        %1152 = vmatprep.subr.bf16.mxu0 0
        %1153 = vmatpush1.bf16.msra.mxu0 0
        %1154 = vmatprep.subr.bf16.mxu0 0
        %1155 = vmatpush1.bf16.msra.mxu0 0
        %1156 = vmatprep.subr.bf16.mxu0 0
        %1157 = vmatpush1.bf16.msra.mxu0 0
        %1158 = vmatprep.subr.bf16.mxu0 0
        %1159 = vmatpush1.bf16.msra.mxu0 0
        %1160 = vmatprep.subr.bf16.mxu0 0
        %1161 = vmatpush1.bf16.msra.mxu0 0
        %1162 = vmatprep.subr.bf16.mxu0 0
        %1163 = vmatpush1.bf16.msra.mxu0 0
        %1164 = vmatprep.subr.bf16.mxu0 0
        %1165 = vmatpush1.bf16.msra.mxu0 0
        %1166 = vmatprep.subr.bf16.mxu0 0
        %1167 = vmatpush1.bf16.msra.mxu0 0
        %1168 = vmatprep.mubr.bf16.mxu0 0
        %1169 = vmatmul.mubr.bf16.gmra.mrb[0].mxu0 %v1131
        %v1170 = vpop.f32.mrb[0].mxu0
        %v1171 = vadd.f32 0.0, %v1170
        %v1172 = vpop.f32.mrb[0].mxu0
        %v1173 = vpop.f32.mrb[0].mxu0
        %v1174 = vpop.f32.mrb[0].mxu0
        %1175 = vdwg.mxu0
        %v1177 = vsel %vm749, %v987, 0
        %v1180 = vsel %vm994, %v368, 0
        %1182 = vmatprep.subr.bf16.mxu0 0
        %1183 = vmatpush1.bf16.msra.mxu0 %v1180
        %1184 = vmatprep.subr.bf16.mxu0 0
        %1185 = vmatpush1.bf16.msra.mxu0 0
        %1186 = vmatprep.subr.bf16.mxu0 0
        %1187 = vmatpush1.bf16.msra.mxu0 0
        %1188 = vmatprep.subr.bf16.mxu0 0
        %1189 = vmatpush1.bf16.msra.mxu0 0
        %1190 = vmatprep.subr.bf16.mxu0 0
        %1191 = vmatpush1.bf16.msra.mxu0 0
        %1192 = vmatprep.subr.bf16.mxu0 0
        %1193 = vmatpush1.bf16.msra.mxu0 0
        %1194 = vmatprep.subr.bf16.mxu0 0
        %1195 = vmatpush1.bf16.msra.mxu0 0
        %1196 = vmatprep.subr.bf16.mxu0 0
        %1197 = vmatpush1.bf16.msra.mxu0 0
        %1198 = vmatprep.subr.bf16.mxu0 0
        %1199 = vmatpush1.bf16.msra.mxu0 0
        %1200 = vmatprep.subr.bf16.mxu0 0
        %1201 = vmatpush1.bf16.msra.mxu0 0
        %1202 = vmatprep.subr.bf16.mxu0 0
        %1203 = vmatpush1.bf16.msra.mxu0 0
        %1204 = vmatprep.subr.bf16.mxu0 0
        %1205 = vmatpush1.bf16.msra.mxu0 0
        %1206 = vmatprep.subr.bf16.mxu0 0
        %1207 = vmatpush1.bf16.msra.mxu0 0
        %1208 = vmatprep.subr.bf16.mxu0 0
        %1209 = vmatpush1.bf16.msra.mxu0 0
        %1210 = vmatprep.subr.bf16.mxu0 0
        %1211 = vmatpush1.bf16.msra.mxu0 0
        %1212 = vmatprep.subr.bf16.mxu0 0
        %1213 = vmatpush1.bf16.msra.mxu0 0
        %1214 = vmatprep.mubr.bf16.mxu0 0
        %1215 = vmatmul.mubr.bf16.gmra.mrb[0].mxu0 %v1177
        %v1216 = vpop.f32.mrb[0].mxu0
        %v1217 = vadd.f32 0.0, %v1216
        %v1218 = vpop.f32.mrb[0].mxu0
        %v1219 = vpop.f32.mrb[0].mxu0
        %v1220 = vpop.f32.mrb[0].mxu0
        %1221 = vdwg.mxu0
        %v1223 = vsel %vm749, %v988, 0
        %v1226 = vsel %vm994, %v369, 0
        %1228 = vmatprep.subr.bf16.mxu0 0
        %1229 = vmatpush1.bf16.msra.mxu0 %v1226
        %1230 = vmatprep.subr.bf16.mxu0 0
        %1231 = vmatpush1.bf16.msra.mxu0 0
        %1232 = vmatprep.subr.bf16.mxu0 0
        %1233 = vmatpush1.bf16.msra.mxu0 0
        %1234 = vmatprep.subr.bf16.mxu0 0
        %1235 = vmatpush1.bf16.msra.mxu0 0
        %1236 = vmatprep.subr.bf16.mxu0 0
        %1237 = vmatpush1.bf16.msra.mxu0 0
        %1238 = vmatprep.subr.bf16.mxu0 0
        %1239 = vmatpush1.bf16.msra.mxu0 0
        %1240 = vmatprep.subr.bf16.mxu0 0
        %1241 = vmatpush1.bf16.msra.mxu0 0
        %1242 = vmatprep.subr.bf16.mxu0 0
        %1243 = vmatpush1.bf16.msra.mxu0 0
        %1244 = vmatprep.subr.bf16.mxu0 0
        %1245 = vmatpush1.bf16.msra.mxu0 0
        %1246 = vmatprep.subr.bf16.mxu0 0
        %1247 = vmatpush1.bf16.msra.mxu0 0
        %1248 = vmatprep.subr.bf16.mxu0 0
        %1249 = vmatpush1.bf16.msra.mxu0 0
        %1250 = vmatprep.subr.bf16.mxu0 0
        %1251 = vmatpush1.bf16.msra.mxu0 0
        %1252 = vmatprep.subr.bf16.mxu0 0
        %1253 = vmatpush1.bf16.msra.mxu0 0
        %1254 = vmatprep.subr.bf16.mxu0 0
        %1255 = vmatpush1.bf16.msra.mxu0 0
        %1256 = vmatprep.subr.bf16.mxu0 0
        %1257 = vmatpush1.bf16.msra.mxu0 0
        %1258 = vmatprep.subr.bf16.mxu0 0
        %1259 = vmatpush1.bf16.msra.mxu0 0
        %1260 = vmatprep.mubr.bf16.mxu0 0
        %1261 = vmatmul.mubr.bf16.gmra.mrb[0].mxu0 %v1223
        %v1262 = vpop.f32.mrb[0].mxu0
        %v1263 = vadd.f32 0.0, %v1262
        %v1264 = vpop.f32.mrb[0].mxu0
        %v1265 = vpop.f32.mrb[0].mxu0
        %v1266 = vpop.f32.mrb[0].mxu0
        %1267 = vdwg.mxu0
        %v1269 = vsel %vm749, %v989, 0
        %v1272 = vsel %vm994, %v370, 0
        %1274 = vmatprep.subr.bf16.mxu0 0
        %1275 = vmatpush1.bf16.msra.mxu0 %v1272
        %1276 = vmatprep.subr.bf16.mxu0 0
        %1277 = vmatpush1.bf16.msra.mxu0 0
        %1278 = vmatprep.subr.bf16.mxu0 0
        %1279 = vmatpush1.bf16.msra.mxu0 0
        %1280 = vmatprep.subr.bf16.mxu0 0
        %1281 = vmatpush1.bf16.msra.mxu0 0
        %1282 = vmatprep.subr.bf16.mxu0 0
        %1283 = vmatpush1.bf16.msra.mxu0 0
        %1284 = vmatprep.subr.bf16.mxu0 0
        %1285 = vmatpush1.bf16.msra.mxu0 0
        %1286 = vmatprep.subr.bf16.mxu0 0
        %1287 = vmatpush1.bf16.msra.mxu0 0
        %1288 = vmatprep.subr.bf16.mxu0 0
        %1289 = vmatpush1.bf16.msra.mxu0 0
        %1290 = vmatprep.subr.bf16.mxu0 0
        %1291 = vmatpush1.bf16.msra.mxu0 0
        %1292 = vmatprep.subr.bf16.mxu0 0
        %1293 = vmatpush1.bf16.msra.mxu0 0
        %1294 = vmatprep.subr.bf16.mxu0 0
        %1295 = vmatpush1.bf16.msra.mxu0 0
        %1296 = vmatprep.subr.bf16.mxu0 0
        %1297 = vmatpush1.bf16.msra.mxu0 0
        %1298 = vmatprep.subr.bf16.mxu0 0
        %1299 = vmatpush1.bf16.msra.mxu0 0
        %1300 = vmatprep.subr.bf16.mxu0 0
        %1301 = vmatpush1.bf16.msra.mxu0 0
        %1302 = vmatprep.subr.bf16.mxu0 0
        %1303 = vmatpush1.bf16.msra.mxu0 0
        %1304 = vmatprep.subr.bf16.mxu0 0
        %1305 = vmatpush1.bf16.msra.mxu0 0
        %1306 = vmatprep.mubr.bf16.mxu0 0
        %1307 = vmatmul.mubr.bf16.gmra.mrb[0].mxu0 %v1269
        %v1308 = vpop.f32.mrb[0].mxu0
        %v1309 = vadd.f32 0.0, %v1308
        %v1310 = vpop.f32.mrb[0].mxu0
        %v1311 = vpop.f32.mrb[0].mxu0
        %v1312 = vpop.f32.mrb[0].mxu0
        %1313 = vdwg.mxu0
        %v1315 = vsel %vm749, %v990, 0
        %v1318 = vsel %vm994, %v371, 0
        %1320 = vmatprep.subr.bf16.mxu0 0
        %1321 = vmatpush1.bf16.msra.mxu0 %v1318
        %1322 = vmatprep.subr.bf16.mxu0 0
        %1323 = vmatpush1.bf16.msra.mxu0 0
        %1324 = vmatprep.subr.bf16.mxu0 0
        %1325 = vmatpush1.bf16.msra.mxu0 0
        %1326 = vmatprep.subr.bf16.mxu0 0
        %1327 = vmatpush1.bf16.msra.mxu0 0
        %1328 = vmatprep.subr.bf16.mxu0 0
        %1329 = vmatpush1.bf16.msra.mxu0 0
        %1330 = vmatprep.subr.bf16.mxu0 0
        %1331 = vmatpush1.bf16.msra.mxu0 0
        %1332 = vmatprep.subr.bf16.mxu0 0
        %1333 = vmatpush1.bf16.msra.mxu0 0
        %1334 = vmatprep.subr.bf16.mxu0 0
        %1335 = vmatpush1.bf16.msra.mxu0 0
        %1336 = vmatprep.subr.bf16.mxu0 0
        %1337 = vmatpush1.bf16.msra.mxu0 0
        %1338 = vmatprep.subr.bf16.mxu0 0
        %1339 = vmatpush1.bf16.msra.mxu0 0
        %1340 = vmatprep.subr.bf16.mxu0 0
        %1341 = vmatpush1.bf16.msra.mxu0 0
        %1342 = vmatprep.subr.bf16.mxu0 0
        %1343 = vmatpush1.bf16.msra.mxu0 0
        %1344 = vmatprep.subr.bf16.mxu0 0
        %1345 = vmatpush1.bf16.msra.mxu0 0
        %1346 = vmatprep.subr.bf16.mxu0 0
        %1347 = vmatpush1.bf16.msra.mxu0 0
        %1348 = vmatprep.subr.bf16.mxu0 0
        %1349 = vmatpush1.bf16.msra.mxu0 0
        %1350 = vmatprep.subr.bf16.mxu0 0
        %1351 = vmatpush1.bf16.msra.mxu0 0
        %1352 = vmatprep.mubr.bf16.mxu0 0
        %1353 = vmatmul.mubr.bf16.gmra.mrb[0].mxu0 %v1315
        %v1354 = vpop.f32.mrb[0].mxu0
        %v1355 = vadd.f32 0.0, %v1354
        %v1356 = vpop.f32.mrb[0].mxu0
        %v1357 = vpop.f32.mrb[0].mxu0
        %v1358 = vpop.f32.mrb[0].mxu0
        %1359 = vdwg.mxu0
        %v1360 = vadd.f32 %v975, %v1033
        %v1361 = vadd.f32 %v976, %v1079
        %v1362 = vadd.f32 %v977, %v1125
        %v1363 = vadd.f32 %v978, %v1171
        %v1364 = vadd.f32 %v979, %v1217
        %v1365 = vadd.f32 %v980, %v1263
        %v1366 = vadd.f32 %v981, %v1309
        %v1367 = vadd.f32 %v982, %v1355
        %1368 = vst.msk [vmem:[#allocation4] sm:$0xff] %vm372, %v1360
        %1369 = vst.msk [vmem:[#allocation4 + $0x8] sm:$0xff] %vm372, %v1361
        %1370 = vst.msk [vmem:[#allocation4 + $0x10] sm:$0xff] %vm372, %v1362
        %1371 = vst.msk [vmem:[#allocation4 + $0x18] sm:$0xff] %vm372, %v1363
        %1372 = vst.msk [vmem:[#allocation4 + $0x20] sm:$0xff] %vm372, %v1364
        %1373 = vst.msk [vmem:[#allocation4 + $0x28] sm:$0xff] %vm372, %v1365
        %1374 = vst.msk [vmem:[#allocation4 + $0x30] sm:$0xff] %vm372, %v1366
        %1375 = vst.msk [vmem:[#allocation4 + $0x38] sm:$0xff] %vm372, %v1367
        %1376 = vst.msk [vmem:[#allocation2] sm:$0xff] %vm918, %v774
        %1377 = vst.msk [vmem:[#allocation2 + $0x8] sm:$0xff] %vm918, %v775
        %1378 = vst.msk [vmem:[#allocation2 + $0x10] sm:$0xff] %vm918, %v776
        %1379 = vst.msk [vmem:[#allocation2 + $0x18] sm:$0xff] %vm918, %v777
        %1380 = vst.msk [vmem:[#allocation2 + $0x20] sm:$0xff] %vm918, %v778
        %1381 = vst.msk [vmem:[#allocation2 + $0x28] sm:$0xff] %vm918, %v779
        %1382 = vst.msk [vmem:[#allocation2 + $0x30] sm:$0xff] %vm918, %v780
        %1383 = vst.msk [vmem:[#allocation2 + $0x38] sm:$0xff] %vm918, %v781
        // Predicated region
        $region45: #{tpu_custom_call.1} parent=39 // pred_check
          %p1384 = pneg %p318
        $region46: #{tpu_custom_call.1} parent=39 // pred_check_branch
          %1386 = sbr.rel (%p1384) target = $region48
        $region47: #{tpu_custom_call.1} parent=39 // pred_region
          %v1387 = vld [vmem:[#allocation3] sm:$0xff]
          %v1388 = vld [vmem:[#allocation3 + $0x8] sm:$0xff]
          %v1389 = vld [vmem:[#allocation3 + $0x10] sm:$0xff]
          %v1390 = vld [vmem:[#allocation3 + $0x18] sm:$0xff]
          %v1391 = vld [vmem:[#allocation3 + $0x20] sm:$0xff]
          %v1392 = vld [vmem:[#allocation3 + $0x28] sm:$0xff]
          %v1393 = vld [vmem:[#allocation3 + $0x30] sm:$0xff]
          %v1394 = vld [vmem:[#allocation3 + $0x38] sm:$0xff]
          %v1395 = vrcp.pop %v1387
          %v1396 = vrcp.pop %v1388
          %v1397 = vrcp.pop %v1389
          %v1398 = vrcp.pop %v1390
          %v1399 = vrcp.pop %v1391
          %v1400 = vrcp.pop %v1392
          %v1401 = vrcp.pop %v1393
          %v1402 = vrcp.pop %v1394
          %v1403 = vld [vmem:[#allocation4] sm:$0xff]
          %v1404 = vld [vmem:[#allocation4 + $0x8] sm:$0xff]
          %v1405 = vld [vmem:[#allocation4 + $0x10] sm:$0xff]
          %v1406 = vld [vmem:[#allocation4 + $0x18] sm:$0xff]
          %v1407 = vld [vmem:[#allocation4 + $0x20] sm:$0xff]
          %v1408 = vld [vmem:[#allocation4 + $0x28] sm:$0xff]
          %v1409 = vld [vmem:[#allocation4 + $0x30] sm:$0xff]
          %v1410 = vld [vmem:[#allocation4 + $0x38] sm:$0xff]
          %1412 = vset.pattern.permute.xlu0 0
          %1413 = vperm.xlu0 %1412, %v1395
          %v1414 = vpop.permute.xlu0 %1413
          %1417 = vset.pattern.permute.xlu0 0
          %1418 = vperm.xlu0 %1417, %v1396
          %v1419 = vpop.permute.xlu0 %1418
          %1422 = vset.pattern.permute.xlu0 0
          %1423 = vperm.xlu0 %1422, %v1397
          %v1424 = vpop.permute.xlu0 %1423
          %1427 = vset.pattern.permute.xlu0 0
          %1428 = vperm.xlu0 %1427, %v1398
          %v1429 = vpop.permute.xlu0 %1428
          %1432 = vset.pattern.permute.xlu0 0
          %1433 = vperm.xlu0 %1432, %v1399
          %v1434 = vpop.permute.xlu0 %1433
          %1437 = vset.pattern.permute.xlu0 0
          %1438 = vperm.xlu0 %1437, %v1400
          %v1439 = vpop.permute.xlu0 %1438
          %1442 = vset.pattern.permute.xlu0 0
          %1443 = vperm.xlu0 %1442, %v1401
          %v1444 = vpop.permute.xlu0 %1443
          %1447 = vset.pattern.permute.xlu0 0
          %1448 = vperm.xlu0 %1447, %v1402
          %v1449 = vpop.permute.xlu0 %1448
          %v1451 = vmul.f32 %v1403, %v1414
          %v1452 = vmul.f32 %v1404, %v1419
          %v1453 = vmul.f32 %v1405, %v1424
          %v1454 = vmul.f32 %v1406, %v1429
          %v1455 = vmul.f32 %v1407, %v1434
          %v1456 = vmul.f32 %v1408, %v1439
          %v1457 = vmul.f32 %v1409, %v1444
          %v1458 = vmul.f32 %v1410, %v1449
          %v1459 = vpack.c.bf16 %v1451, %v1451
          %v1460 = vpack.c.bf16 %v1452, %v1452
          %v1461 = vpack.c.bf16 %v1453, %v1453
          %v1462 = vpack.c.bf16 %v1454, %v1454
          %v1463 = vpack.c.bf16 %v1455, %v1455
          %v1464 = vpack.c.bf16 %v1456, %v1456
          %v1465 = vpack.c.bf16 %v1457, %v1457
          %v1466 = vpack.c.bf16 %v1458, %v1458
          %v1467 = vld [vmem:[%s3] sm:$0x3]
          %s1468 = scalar_lea.vmem %s3, 2
          %v1469 = vld [vmem:[%s1468] sm:$0x3]
          %v1471 = vsel %vm372, %v1460, 0
          %vm1473 = vcmask 1041408
          %v1475 = vsel %vm1473, %v1469, 0
          %1477 = vmatprep.subr.bf16.mxu0 0
          %1478 = vmatpush1.bf16.msra.mxu0 %v1475
          %1479 = vmatprep.subr.bf16.mxu0 0
          %1480 = vmatpush1.bf16.msra.mxu0 0
          %1481 = vmatprep.subr.bf16.mxu0 0
          %1482 = vmatpush1.bf16.msra.mxu0 0
          %1483 = vmatprep.subr.bf16.mxu0 0
          %1484 = vmatpush1.bf16.msra.mxu0 0
          %1485 = vmatprep.subr.bf16.mxu0 0
          %1486 = vmatpush1.bf16.msra.mxu0 0
          %1487 = vmatprep.subr.bf16.mxu0 0
          %1488 = vmatpush1.bf16.msra.mxu0 0
          %1489 = vmatprep.subr.bf16.mxu0 0
          %1490 = vmatpush1.bf16.msra.mxu0 0
          %1491 = vmatprep.subr.bf16.mxu0 0
          %1492 = vmatpush1.bf16.msra.mxu0 0
          %1493 = vmatprep.subr.bf16.mxu0 0
          %1494 = vmatpush1.bf16.msra.mxu0 0
          %1495 = vmatprep.subr.bf16.mxu0 0
          %1496 = vmatpush1.bf16.msra.mxu0 0
          %1497 = vmatprep.subr.bf16.mxu0 0
          %1498 = vmatpush1.bf16.msra.mxu0 0
          %1499 = vmatprep.subr.bf16.mxu0 0
          %1500 = vmatpush1.bf16.msra.mxu0 0
          %1501 = vmatprep.subr.bf16.mxu0 0
          %1502 = vmatpush1.bf16.msra.mxu0 0
          %1503 = vmatprep.subr.bf16.mxu0 0
          %1504 = vmatpush1.bf16.msra.mxu0 0
          %1505 = vmatprep.subr.bf16.mxu0 0
          %1506 = vmatpush1.bf16.msra.mxu0 0
          %1507 = vmatprep.subr.bf16.mxu0 0
          %1508 = vmatpush1.bf16.msra.mxu0 0
          %1509 = vmatprep.mubr.bf16.mxu0 0
          %1510 = vmatmul.mubr.bf16.gmra.mrb[0].mxu0 %v1471
          %v1511 = vpop.f32.mrb[0].mxu0
          %v1512 = vadd.f32 0.0, %v1511
          %v1513 = vpop.f32.mrb[0].mxu0
          %v1514 = vpop.f32.mrb[0].mxu0
          %v1515 = vpop.f32.mrb[0].mxu0
          %1516 = vdwg.mxu0
          %v1518 = vsel %vm372, %v1459, 0
          %v1521 = vsel %vm1473, %v1467, 0
          %1523 = vmatprep.subr.bf16.mxu0 0
          %1524 = vmatpush1.bf16.msra.mxu0 %v1521
          %1525 = vmatprep.subr.bf16.mxu0 0
          %1526 = vmatpush1.bf16.msra.mxu0 0
          %1527 = vmatprep.subr.bf16.mxu0 0
          %1528 = vmatpush1.bf16.msra.mxu0 0
          %1529 = vmatprep.subr.bf16.mxu0 0
          %1530 = vmatpush1.bf16.msra.mxu0 0
          %1531 = vmatprep.subr.bf16.mxu0 0
          %1532 = vmatpush1.bf16.msra.mxu0 0
          %1533 = vmatprep.subr.bf16.mxu0 0
          %1534 = vmatpush1.bf16.msra.mxu0 0
          %1535 = vmatprep.subr.bf16.mxu0 0
          %1536 = vmatpush1.bf16.msra.mxu0 0
          %1537 = vmatprep.subr.bf16.mxu0 0
          %1538 = vmatpush1.bf16.msra.mxu0 0
          %1539 = vmatprep.subr.bf16.mxu0 0
          %1540 = vmatpush1.bf16.msra.mxu0 0
          %1541 = vmatprep.subr.bf16.mxu0 0
          %1542 = vmatpush1.bf16.msra.mxu0 0
          %1543 = vmatprep.subr.bf16.mxu0 0
          %1544 = vmatpush1.bf16.msra.mxu0 0
          %1545 = vmatprep.subr.bf16.mxu0 0
          %1546 = vmatpush1.bf16.msra.mxu0 0
          %1547 = vmatprep.subr.bf16.mxu0 0
          %1548 = vmatpush1.bf16.msra.mxu0 0
          %1549 = vmatprep.subr.bf16.mxu0 0
          %1550 = vmatpush1.bf16.msra.mxu0 0
          %1551 = vmatprep.subr.bf16.mxu0 0
          %1552 = vmatpush1.bf16.msra.mxu0 0
          %1553 = vmatprep.subr.bf16.mxu0 0
          %1554 = vmatpush1.bf16.msra.mxu0 0
          %1555 = vmatprep.mubr.bf16.mxu0 0
          %1556 = vmatmul.mubr.bf16.gmra.mrb[0].mxu0 %v1518
          %v1557 = vpop.f32.mrb[0].mxu0
          %v1558 = vadd.f32 %v1512, %v1557
          %v1559 = vpop.f32.mrb[0].mxu0
          %v1560 = vpop.f32.mrb[0].mxu0
          %v1561 = vpop.f32.mrb[0].mxu0
          %1562 = vdwg.mxu0
          %s1563 = scalar_lea.vmem %s3, 4
          %v1564 = vld [vmem:[%s1563] sm:$0x3]
          %v1566 = vsel %vm372, %v1461, 0
          %v1569 = vsel %vm1473, %v1564, 0
          %1571 = vmatprep.subr.bf16.mxu0 0
          %1572 = vmatpush1.bf16.msra.mxu0 %v1569
          %1573 = vmatprep.subr.bf16.mxu0 0
          %1574 = vmatpush1.bf16.msra.mxu0 0
          %1575 = vmatprep.subr.bf16.mxu0 0
          %1576 = vmatpush1.bf16.msra.mxu0 0
          %1577 = vmatprep.subr.bf16.mxu0 0
          %1578 = vmatpush1.bf16.msra.mxu0 0
          %1579 = vmatprep.subr.bf16.mxu0 0
          %1580 = vmatpush1.bf16.msra.mxu0 0
          %1581 = vmatprep.subr.bf16.mxu0 0
          %1582 = vmatpush1.bf16.msra.mxu0 0
          %1583 = vmatprep.subr.bf16.mxu0 0
          %1584 = vmatpush1.bf16.msra.mxu0 0
          %1585 = vmatprep.subr.bf16.mxu0 0
          %1586 = vmatpush1.bf16.msra.mxu0 0
          %1587 = vmatprep.subr.bf16.mxu0 0
          %1588 = vmatpush1.bf16.msra.mxu0 0
          %1589 = vmatprep.subr.bf16.mxu0 0
          %1590 = vmatpush1.bf16.msra.mxu0 0
          %1591 = vmatprep.subr.bf16.mxu0 0
          %1592 = vmatpush1.bf16.msra.mxu0 0
          %1593 = vmatprep.subr.bf16.mxu0 0
          %1594 = vmatpush1.bf16.msra.mxu0 0
          %1595 = vmatprep.subr.bf16.mxu0 0
          %1596 = vmatpush1.bf16.msra.mxu0 0
          %1597 = vmatprep.subr.bf16.mxu0 0
          %1598 = vmatpush1.bf16.msra.mxu0 0
          %1599 = vmatprep.subr.bf16.mxu0 0
          %1600 = vmatpush1.bf16.msra.mxu0 0
          %1601 = vmatprep.subr.bf16.mxu0 0
          %1602 = vmatpush1.bf16.msra.mxu0 0
          %1603 = vmatprep.mubr.bf16.mxu0 0
          %1604 = vmatmul.mubr.bf16.gmra.mrb[0].mxu0 %v1566
          %v1605 = vpop.f32.mrb[0].mxu0
          %v1606 = vadd.f32 0.0, %v1605
          %v1607 = vpop.f32.mrb[0].mxu0
          %v1608 = vpop.f32.mrb[0].mxu0
          %v1609 = vpop.f32.mrb[0].mxu0
          %1610 = vdwg.mxu0
          %v1611 = vadd.f32 %v1558, %v1606
          %s1612 = scalar_lea.vmem %s3, 6
          %v1613 = vld [vmem:[%s1612] sm:$0x3]
          %v1615 = vsel %vm372, %v1462, 0
          %v1618 = vsel %vm1473, %v1613, 0
          %1620 = vmatprep.subr.bf16.mxu0 0
          %1621 = vmatpush1.bf16.msra.mxu0 %v1618
          %1622 = vmatprep.subr.bf16.mxu0 0
          %1623 = vmatpush1.bf16.msra.mxu0 0
          %1624 = vmatprep.subr.bf16.mxu0 0
          %1625 = vmatpush1.bf16.msra.mxu0 0
          %1626 = vmatprep.subr.bf16.mxu0 0
          %1627 = vmatpush1.bf16.msra.mxu0 0
          %1628 = vmatprep.subr.bf16.mxu0 0
          %1629 = vmatpush1.bf16.msra.mxu0 0
          %1630 = vmatprep.subr.bf16.mxu0 0
          %1631 = vmatpush1.bf16.msra.mxu0 0
          %1632 = vmatprep.subr.bf16.mxu0 0
          %1633 = vmatpush1.bf16.msra.mxu0 0
          %1634 = vmatprep.subr.bf16.mxu0 0
          %1635 = vmatpush1.bf16.msra.mxu0 0
          %1636 = vmatprep.subr.bf16.mxu0 0
          %1637 = vmatpush1.bf16.msra.mxu0 0
          %1638 = vmatprep.subr.bf16.mxu0 0
          %1639 = vmatpush1.bf16.msra.mxu0 0
          %1640 = vmatprep.subr.bf16.mxu0 0
          %1641 = vmatpush1.bf16.msra.mxu0 0
          %1642 = vmatprep.subr.bf16.mxu0 0
          %1643 = vmatpush1.bf16.msra.mxu0 0
          %1644 = vmatprep.subr.bf16.mxu0 0
          %1645 = vmatpush1.bf16.msra.mxu0 0
          %1646 = vmatprep.subr.bf16.mxu0 0
          %1647 = vmatpush1.bf16.msra.mxu0 0
          %1648 = vmatprep.subr.bf16.mxu0 0
          %1649 = vmatpush1.bf16.msra.mxu0 0
          %1650 = vmatprep.subr.bf16.mxu0 0
          %1651 = vmatpush1.bf16.msra.mxu0 0
          %1652 = vmatprep.mubr.bf16.mxu0 0
          %1653 = vmatmul.mubr.bf16.gmra.mrb[0].mxu0 %v1615
          %v1654 = vpop.f32.mrb[0].mxu0
          %v1655 = vadd.f32 0.0, %v1654
          %v1656 = vpop.f32.mrb[0].mxu0
          %v1657 = vpop.f32.mrb[0].mxu0
          %v1658 = vpop.f32.mrb[0].mxu0
          %1659 = vdwg.mxu0
          %v1660 = vadd.f32 %v1611, %v1655
          %s1661 = scalar_lea.vmem %s3, 8
          %v1662 = vld [vmem:[%s1661] sm:$0x3]
          %v1664 = vsel %vm372, %v1463, 0
          %v1667 = vsel %vm1473, %v1662, 0
          %1669 = vmatprep.subr.bf16.mxu0 0
          %1670 = vmatpush1.bf16.msra.mxu0 %v1667
          %1671 = vmatprep.subr.bf16.mxu0 0
          %1672 = vmatpush1.bf16.msra.mxu0 0
          %1673 = vmatprep.subr.bf16.mxu0 0
          %1674 = vmatpush1.bf16.msra.mxu0 0
          %1675 = vmatprep.subr.bf16.mxu0 0
          %1676 = vmatpush1.bf16.msra.mxu0 0
          %1677 = vmatprep.subr.bf16.mxu0 0
          %1678 = vmatpush1.bf16.msra.mxu0 0
          %1679 = vmatprep.subr.bf16.mxu0 0
          %1680 = vmatpush1.bf16.msra.mxu0 0
          %1681 = vmatprep.subr.bf16.mxu0 0
          %1682 = vmatpush1.bf16.msra.mxu0 0
          %1683 = vmatprep.subr.bf16.mxu0 0
          %1684 = vmatpush1.bf16.msra.mxu0 0
          %1685 = vmatprep.subr.bf16.mxu0 0
          %1686 = vmatpush1.bf16.msra.mxu0 0
          %1687 = vmatprep.subr.bf16.mxu0 0
          %1688 = vmatpush1.bf16.msra.mxu0 0
          %1689 = vmatprep.subr.bf16.mxu0 0
          %1690 = vmatpush1.bf16.msra.mxu0 0
          %1691 = vmatprep.subr.bf16.mxu0 0
          %1692 = vmatpush1.bf16.msra.mxu0 0
          %1693 = vmatprep.subr.bf16.mxu0 0
          %1694 = vmatpush1.bf16.msra.mxu0 0
          %1695 = vmatprep.subr.bf16.mxu0 0
          %1696 = vmatpush1.bf16.msra.mxu0 0
          %1697 = vmatprep.subr.bf16.mxu0 0
          %1698 = vmatpush1.bf16.msra.mxu0 0
          %1699 = vmatprep.subr.bf16.mxu0 0
          %1700 = vmatpush1.bf16.msra.mxu0 0
          %1701 = vmatprep.mubr.bf16.mxu0 0
          %1702 = vmatmul.mubr.bf16.gmra.mrb[0].mxu0 %v1664
          %v1703 = vpop.f32.mrb[0].mxu0
          %v1704 = vadd.f32 0.0, %v1703
          %v1705 = vpop.f32.mrb[0].mxu0
          %v1706 = vpop.f32.mrb[0].mxu0
          %v1707 = vpop.f32.mrb[0].mxu0
          %1708 = vdwg.mxu0
          %v1709 = vadd.f32 %v1660, %v1704
          %s1710 = scalar_lea.vmem %s3, 10
          %v1711 = vld [vmem:[%s1710] sm:$0x3]
          %v1713 = vsel %vm372, %v1464, 0
          %v1716 = vsel %vm1473, %v1711, 0
          %1718 = vmatprep.subr.bf16.mxu0 0
          %1719 = vmatpush1.bf16.msra.mxu0 %v1716
          %1720 = vmatprep.subr.bf16.mxu0 0
          %1721 = vmatpush1.bf16.msra.mxu0 0
          %1722 = vmatprep.subr.bf16.mxu0 0
          %1723 = vmatpush1.bf16.msra.mxu0 0
          %1724 = vmatprep.subr.bf16.mxu0 0
          %1725 = vmatpush1.bf16.msra.mxu0 0
          %1726 = vmatprep.subr.bf16.mxu0 0
          %1727 = vmatpush1.bf16.msra.mxu0 0
          %1728 = vmatprep.subr.bf16.mxu0 0
          %1729 = vmatpush1.bf16.msra.mxu0 0
          %1730 = vmatprep.subr.bf16.mxu0 0
          %1731 = vmatpush1.bf16.msra.mxu0 0
          %1732 = vmatprep.subr.bf16.mxu0 0
          %1733 = vmatpush1.bf16.msra.mxu0 0
          %1734 = vmatprep.subr.bf16.mxu0 0
          %1735 = vmatpush1.bf16.msra.mxu0 0
          %1736 = vmatprep.subr.bf16.mxu0 0
          %1737 = vmatpush1.bf16.msra.mxu0 0
          %1738 = vmatprep.subr.bf16.mxu0 0
          %1739 = vmatpush1.bf16.msra.mxu0 0
          %1740 = vmatprep.subr.bf16.mxu0 0
          %1741 = vmatpush1.bf16.msra.mxu0 0
          %1742 = vmatprep.subr.bf16.mxu0 0
          %1743 = vmatpush1.bf16.msra.mxu0 0
          %1744 = vmatprep.subr.bf16.mxu0 0
          %1745 = vmatpush1.bf16.msra.mxu0 0
          %1746 = vmatprep.subr.bf16.mxu0 0
          %1747 = vmatpush1.bf16.msra.mxu0 0
          %1748 = vmatprep.subr.bf16.mxu0 0
          %1749 = vmatpush1.bf16.msra.mxu0 0
          %1750 = vmatprep.mubr.bf16.mxu0 0
          %1751 = vmatmul.mubr.bf16.gmra.mrb[0].mxu0 %v1713
          %v1752 = vpop.f32.mrb[0].mxu0
          %v1753 = vadd.f32 0.0, %v1752
          %v1754 = vpop.f32.mrb[0].mxu0
          %v1755 = vpop.f32.mrb[0].mxu0
          %v1756 = vpop.f32.mrb[0].mxu0
          %1757 = vdwg.mxu0
          %v1758 = vadd.f32 %v1709, %v1753
          %s1759 = scalar_lea.vmem %s3, 12
          %v1760 = vld [vmem:[%s1759] sm:$0x3]
          %v1762 = vsel %vm372, %v1465, 0
          %v1765 = vsel %vm1473, %v1760, 0
          %1767 = vmatprep.subr.bf16.mxu0 0
          %1768 = vmatpush1.bf16.msra.mxu0 %v1765
          %1769 = vmatprep.subr.bf16.mxu0 0
          %1770 = vmatpush1.bf16.msra.mxu0 0
          %1771 = vmatprep.subr.bf16.mxu0 0
          %1772 = vmatpush1.bf16.msra.mxu0 0
          %1773 = vmatprep.subr.bf16.mxu0 0
          %1774 = vmatpush1.bf16.msra.mxu0 0
          %1775 = vmatprep.subr.bf16.mxu0 0
          %1776 = vmatpush1.bf16.msra.mxu0 0
          %1777 = vmatprep.subr.bf16.mxu0 0
          %1778 = vmatpush1.bf16.msra.mxu0 0
          %1779 = vmatprep.subr.bf16.mxu0 0
          %1780 = vmatpush1.bf16.msra.mxu0 0
          %1781 = vmatprep.subr.bf16.mxu0 0
          %1782 = vmatpush1.bf16.msra.mxu0 0
          %1783 = vmatprep.subr.bf16.mxu0 0
          %1784 = vmatpush1.bf16.msra.mxu0 0
          %1785 = vmatprep.subr.bf16.mxu0 0
          %1786 = vmatpush1.bf16.msra.mxu0 0
          %1787 = vmatprep.subr.bf16.mxu0 0
          %1788 = vmatpush1.bf16.msra.mxu0 0
          %1789 = vmatprep.subr.bf16.mxu0 0
          %1790 = vmatpush1.bf16.msra.mxu0 0
          %1791 = vmatprep.subr.bf16.mxu0 0
          %1792 = vmatpush1.bf16.msra.mxu0 0
          %1793 = vmatprep.subr.bf16.mxu0 0
          %1794 = vmatpush1.bf16.msra.mxu0 0
          %1795 = vmatprep.subr.bf16.mxu0 0
          %1796 = vmatpush1.bf16.msra.mxu0 0
          %1797 = vmatprep.subr.bf16.mxu0 0
          %1798 = vmatpush1.bf16.msra.mxu0 0
          %1799 = vmatprep.mubr.bf16.mxu0 0
          %1800 = vmatmul.mubr.bf16.gmra.mrb[0].mxu0 %v1762
          %v1801 = vpop.f32.mrb[0].mxu0
          %v1802 = vadd.f32 0.0, %v1801
          %v1803 = vpop.f32.mrb[0].mxu0
          %v1804 = vpop.f32.mrb[0].mxu0
          %v1805 = vpop.f32.mrb[0].mxu0
          %1806 = vdwg.mxu0
          %v1807 = vadd.f32 %v1758, %v1802
          %s1808 = scalar_lea.vmem %s3, 14
          %v1809 = vld [vmem:[%s1808] sm:$0x3]
          %v1811 = vsel %vm372, %v1466, 0
          %v1814 = vsel %vm1473, %v1809, 0
          %1816 = vmatprep.subr.bf16.mxu0 0
          %1817 = vmatpush1.bf16.msra.mxu0 %v1814
          %1818 = vmatprep.subr.bf16.mxu0 0
          %1819 = vmatpush1.bf16.msra.mxu0 0
          %1820 = vmatprep.subr.bf16.mxu0 0
          %1821 = vmatpush1.bf16.msra.mxu0 0
          %1822 = vmatprep.subr.bf16.mxu0 0
          %1823 = vmatpush1.bf16.msra.mxu0 0
          %1824 = vmatprep.subr.bf16.mxu0 0
          %1825 = vmatpush1.bf16.msra.mxu0 0
          %1826 = vmatprep.subr.bf16.mxu0 0
          %1827 = vmatpush1.bf16.msra.mxu0 0
          %1828 = vmatprep.subr.bf16.mxu0 0
          %1829 = vmatpush1.bf16.msra.mxu0 0
          %1830 = vmatprep.subr.bf16.mxu0 0
          %1831 = vmatpush1.bf16.msra.mxu0 0
          %1832 = vmatprep.subr.bf16.mxu0 0
          %1833 = vmatpush1.bf16.msra.mxu0 0
          %1834 = vmatprep.subr.bf16.mxu0 0
          %1835 = vmatpush1.bf16.msra.mxu0 0
          %1836 = vmatprep.subr.bf16.mxu0 0
          %1837 = vmatpush1.bf16.msra.mxu0 0
          %1838 = vmatprep.subr.bf16.mxu0 0
          %1839 = vmatpush1.bf16.msra.mxu0 0
          %1840 = vmatprep.subr.bf16.mxu0 0
          %1841 = vmatpush1.bf16.msra.mxu0 0
          %1842 = vmatprep.subr.bf16.mxu0 0
          %1843 = vmatpush1.bf16.msra.mxu0 0
          %1844 = vmatprep.subr.bf16.mxu0 0
          %1845 = vmatpush1.bf16.msra.mxu0 0
          %1846 = vmatprep.subr.bf16.mxu0 0
          %1847 = vmatpush1.bf16.msra.mxu0 0
          %1848 = vmatprep.mubr.bf16.mxu0 0
          %1849 = vmatmul.mubr.bf16.gmra.mrb[0].mxu0 %v1811
          %v1850 = vpop.f32.mrb[0].mxu0
          %v1851 = vadd.f32 0.0, %v1850
          %v1852 = vpop.f32.mrb[0].mxu0
          %v1853 = vpop.f32.mrb[0].mxu0
          %v1854 = vpop.f32.mrb[0].mxu0
          %1855 = vdwg.mxu0
          %v1856 = vadd.f32 %v1807, %v1851
          %v1857 = vld [vmem:[%s4] sm:$0x1]
          %v1859 = vlaneseq
          %v1860 = vshrl.u32 %v1859, 7
          %v1861 = vsub.s32 0, %v1860
          %v1862 = vrot.slane %v1857, %v1861
          %v1864 = vadd.f32 %v1856, %v1862
          %vm1865 = vcmask 261120
          %1866 = vst.msk [vmem:[%s292] sm:$0xff] %vm1865, %v1864
        $region48: #{tpu_custom_call.1} parent=39 // pred_fallthru
          _
        %s1867 = sand.u32 %s174, 1
        %s1868 = scalar_lea.sflag [#allocation6], %s1867
        %s1869 = sand.u32 %s174, 1
        %s1870 = smul.addr %s1869, 8
        %s1871 = scalar_lea.vmem [#allocation5], %s1870
        // Predicated region
        $region49: #{tpu_custom_call.1} parent=39 // pred_check
          %p1872 = pneg %p184
        $region50: #{tpu_custom_call.1} parent=39 // pred_check_branch
          %1874 = sbr.rel (%p1872) target = $region52
        $region51: #{tpu_custom_call.1} parent=39 // pred_region
          %s1876 = ssub.s32 128, 128
          %1877 = vsyncadd %s1868, %s1876
          %s1878 = sadd.s32 %s25, %s24
          %s1879 = smul.addr %s1878, 128
          %s1880 = scalar_lea.hbm %s5, %s1879
          %s1882 = sshll.u32 %s1871, 4
          %s1883 = int_to_ptr.vmem [resolvable:$true] %s1882
          %1885 = dma.vmem_to_hbm [thread:$0]  %s1883, 128, %s1880, %s1868
        $region52: #{tpu_custom_call.1} parent=39 // pred_fallthru
          _
      $region40: #{tpu_custom_call.1} parent=5 // pred_fallthru
        _
      %p1886 = scmp.le.s32.totalorder 2, %s14
      // Predicated region
      $region53: #{tpu_custom_call.1} parent=5 // pred_check
        %p1887 = pneg %p1886
      $region54: #{tpu_custom_call.1} parent=5 // pred_check_branch
        %1889 = sbr.rel (%p1887) target = $region56
      $region55: #{tpu_custom_call.1} parent=5 // pred_region
        %s1890 = ssub.s32 %s14, 2
        // Predicated region
        $region57: #{tpu_custom_call.1} parent=55 // pred_check
          %p1891 = pneg %p190
        $region58: #{tpu_custom_call.1} parent=55 // pred_check_branch
          %1893 = sbr.rel (%p1891) target = $region60
        $region59: #{tpu_custom_call.1} parent=55 // pred_region
          %s1894 = sand.u32 %s175, 1
          %s1895 = scalar_lea.sflag [#allocation6], %s1894
          %s1896 = sand.u32 %s175, 1
          %s1897 = smul.addr %s1896, 8
          %s1898 = scalar_lea.vmem [#allocation5], %s1897
          %1899 = dma.done %s1895, 128
        $region60: #{tpu_custom_call.1} parent=55 // pred_fallthru
          _
      $region56: #{tpu_custom_call.1} parent=5 // pred_fallthru
        _
    $region6: #{tpu_custom_call.1} parent=1 // loop_footer
      %s18 = sadd.s32 1, %s14
    $region7: #{tpu_custom_call.1} parent=1 // loop_footer_branch
      %13 = sbr.rel target = $region3
    $region8: #{tpu_custom_call.1} parent=1 // loop_exit
      _
    %1900 = vsyncpa [#allocation6], 1
    %s1901 = scalar_lea.sflag [#allocation6], 1
    %1902 = vsyncpa %s1901, 1

</llo_original>
